<compile_context>
chip_gen: v6e
topology: v6e:2x2x1
jax: 0.10.0
libtpu: 0.0.40
codegen_flags: <defaults>
</compile_context>

<pallas_src>
import jax
import jax.numpy as jnp
from jax import lax
from jax.experimental import pallas as pl
from jax.experimental.pallas import tpu as pltpu

# --------- config constants (mirror SIM3Recon.__init__ defaults) ----------------
C_DIM = 32            # cfg['model']['encoder']['c_dim']
HIDDEN = 64           # decoder hidden size
LANE = 128
W_S = 0.0
W_T = 0.0
W_UNI = 1.0
W_NSS = 1.0
LOSS_TH = 1.0
LOSS_NEAR_LAMBDA = 1.0
LOSS_FAR_LAMBDA = 0.1
SDF2OCC_FACTOR = -1.0
SCALE_GAIN = 1.0      # synthetic scale head
SCALE_BIAS = 0.0

# ---- column offsets inside the single packed (HIDDEN, W_COLS) weight slab ------
_O_W1 = 0                      # dec_w1   (H, H)   cols   0:64
_O_WPF = _O_W1 + HIDDEN        # dec_wpf  (H, C)   cols  64:96
_O_WC = _O_WPF + C_DIM         # dec_wc   (H, C)   cols  96:128
_O_W2 = _O_WC + C_DIM          # enc_w2   (C, C)   cols 128:160 (rows 0:C)
_O_W3 = _O_W2 + C_DIM          # enc_w3   (C, C)   cols 160:192 (rows 0:C)
_O_VEC = _O_W3 + C_DIM         # wa, ba, wpl, b1, b2, wo_col, bo  cols 192:199
W_COLS = 256                   # zero-padded to a lane-tile multiple


# =====================  fused forward kernel  ====================================
def _fused_kernel(pcl_ref, q_ref, gt_ref, w_ref, err_ref, occ_ref, scl_ref):
    C, H = C_DIM, HIDDEN
    f32 = jnp.float32

    # Single packed weight slab (one constant-index DMA, resident across steps).
    wmat = w_ref[...]                                     # (H, 256) = 16 vregs
    w1 = wmat[:, _O_W1:_O_W1 + H]                         # (H, H)
    wpf = wmat[:, _O_WPF:_O_WPF + C]                      # (H, C)
    wc = wmat[:, _O_WC:_O_WC + C]                         # (H, C)
    w2 = wmat[0:C, _O_W2:_O_W2 + C]                       # (C, C)
    w3 = wmat[0:C, _O_W3:_O_W3 + C]                       # (C, C)
    wa = wmat[0:C, _O_VEC + 0:_O_VEC + 1]                 # (C, 1)
    ba = wmat[0:C, _O_VEC + 1:_O_VEC + 2]                 # (C, 1)
    wpl = wmat[:, _O_VEC + 2:_O_VEC + 3]                  # (H, 1)
    b1 = wmat[:, _O_VEC + 3:_O_VEC + 4]                   # (H, 1)
    b2 = wmat[:, _O_VEC + 4:_O_VEC + 5]                   # (H, 1)
    wo = wmat[:, _O_VEC + 5:_O_VEC + 6]                   # (H, 1) output weight (column)
    bo = wmat[0:1, _O_VEC + 6:_O_VEC + 7]                 # (1, 1)

    b_blk = pcl_ref.shape[0]
    n_pts = pcl_ref.shape[2]
    mq = gt_ref.shape[2]                                  # loss-query width (128-multiple)

    # Static unroll over the batch block: amortizes per-grid-step overhead.
    for bb in range(b_blk):
        # ---------------- encoder (stand-in SIM(3)-equivariant encoder) ----------
        xT = pcl_ref[bb]                                          # (3, N) lane-dense
        cen = jnp.mean(xT, axis=1, keepdims=True)                 # (3, 1)  centroid == t
        xc = xT - cen
        d = jnp.sum(xc * xc, axis=0, keepdims=True)               # (1, N) invariant radii^2
        h = jnp.maximum(wa * d + ba, 0.0)                         # (C, N) VN-style gate
        # equivariant pooled vector features: vm[c, i] = mean_n h[c, n] * xc[i, n]
        vm = lax.dot_general(h, xc, (((1,), (1,)), ((), ())),
                             preferred_element_type=f32) * (1.0 / n_pts)   # (C, 3)
        z_so3 = jnp.dot(w2, vm, preferred_element_type=f32)       # (C, 3)
        hm = jnp.mean(h, axis=1, keepdims=True)                   # (C, 1)
        z_inv = jnp.dot(w3, hm, preferred_element_type=f32)       # (C, 1)
        rad = jnp.mean(jnp.sqrt(d + 1e-8), axis=1, keepdims=True) # (1, 1)
        scale = jax.nn.softplus(SCALE_GAIN * rad + SCALE_BIAS)    # (1, 1)
        inv_s = 1.0 / scale

        # ---- refolded first decoder layer (TODO(synk): stand-in ONet decoder) ---
        # h1 = relu([wpf @ z_so3 | wpl] @ [qn; |qn|] + wc @ z_inv + b1)
        w4 = jnp.concatenate(
            [jnp.dot(wpf, z_so3, preferred_element_type=f32), wpl], axis=1)  # (H, 4)
        b_eff = jnp.dot(wc, z_inv, preferred_element_type=f32) + b1          # (H, 1)

        def decode(qT):                                           # (3, M) -> sdf (1, M)
            qn = (qT - cen) * inv_s                               # (query - t) / s
            ln = jnp.sqrt(jnp.sum(qn * qn, axis=0, keepdims=True))
            q4 = jnp.concatenate([qn, ln], axis=0)                # (4, M)
            h1 = jnp.maximum(jnp.dot(w4, q4, preferred_element_type=f32) + b_eff, 0.0)
            h2 = jnp.maximum(jnp.dot(w1, h1, preferred_element_type=f32) + b2, 0.0)
            # output layer as multiply + sublane reduce (XLU slack, no transpose)
            return jnp.sum(h2 * wo, axis=0, keepdims=True) + bo   # (1, M)

        qT_all = q_ref[bb]                                        # (3, Mq_pad + Me_pad)
        sdf_q = decode(qT_all[:, :mq])                            # loss chunk (tile-aligned)
        sdf_e = decode(qT_all[:, mq:])                            # eval chunk

        err_ref[bb] = jnp.abs(sdf_q - gt_ref[bb])                 # sdf_error_i, lane-dense
        occ_ref[bb] = jax.nn.sigmoid(SDF2OCC_FACTOR * sdf_e)      # Bernoulli(logits).probs
        scl_ref[bb] = jnp.broadcast_to(scale, (1, LANE))          # lane-dense scalar out


# =====================  helpers  =================================================
def _ceil_to(x, m):
    return ((x + m - 1) // m) * m


def _pick_batch_block(batch):
    # Amortize ~0.35us grid-step overhead while keeping >=2 steps for megacore.
    for blk in (8, 4, 2):
        if batch % blk == 0 and batch // blk >= 2:
            return blk
    return 1


def _sdf_loss(err):
    near = (err < LOSS_TH).astype(err.dtype)
    return err * near * LOSS_NEAR_LAMBDA + err * (1.0 - near) * LOSS_FAR_LAMBDA


def pack_weights(params):
    """Pack all 12 weight/bias tensors into one lane-dense (H, 256) f32 slab."""
    C, H = C_DIM, HIDDEN
    w = jnp.zeros((H, W_COLS), jnp.float32)
    w = w.at[:, _O_W1:_O_W1 + H].set(params['dec_w1'])
    w = w.at[:, _O_WPF:_O_WPF + C].set(params['dec_wpf'])
    w = w.at[:, _O_WC:_O_WC + C].set(params['dec_wc'])
    w = w.at[0:C, _O_W2:_O_W2 + C].set(params['enc_w2'])
    w = w.at[0:C, _O_W3:_O_W3 + C].set(params['enc_w3'])
    w = w.at[0:C, _O_VEC + 0:_O_VEC + 1].set(params['enc_wa'])
    w = w.at[0:C, _O_VEC + 1:_O_VEC + 2].set(params['enc_ba'])
    w = w.at[:, _O_VEC + 2:_O_VEC + 3].set(params['dec_wpl'])
    w = w.at[:, _O_VEC + 3:_O_VEC + 4].set(params['dec_b1'])
    w = w.at[:, _O_VEC + 4:_O_VEC + 5].set(params['dec_b2'])
    w = w.at[:, _O_VEC + 5:_O_VEC + 6].set(params['dec_wo'].T)   # store as column
    w = w.at[0:1, _O_VEC + 6:_O_VEC + 7].set(params['dec_bo'])
    return w


# =====================  full forward (phase='val', viz_flag=False) ==============
def sim3recon_forward(params, input_pack):
    output = {}
    assert input_pack['phase'] == 'val', "only the deterministic 'val' path is implemented"

    inputs = input_pack['inputs']                              # (B, N, 3)
    uni = input_pack['points.uni']                             # (B, Nu, 3)
    nss = input_pack['points.nss']                             # (B, Nn, 3)
    B, N, _ = inputs.shape
    Nu, Nn = uni.shape[1], nss.shape[1]
    Mq = Nu + Nn
    eval_pts = input_pack['eval.points'].reshape(B, -1, 3)     # (B, Me, 3)
    Me = eval_pts.shape[1]

    # Keep the uni|nss / eval split on a 128-lane boundary, total width a 256 multiple.
    mq_pad = _ceil_to(Mq, LANE)
    me_pad = _ceil_to(Me, LANE)
    if (mq_pad + me_pad) % 256:
        me_pad += LANE
    mtot = mq_pad + me_pad

    # Lane-dense (B, 3, K) slabs -> contiguous DMA rows, no in-kernel transposes/concats.
    pcl_T = jnp.transpose(inputs, (0, 2, 1))                   # (B, 3, N)
    q_loss = jnp.pad(jnp.concatenate([uni, nss], axis=1),
                     ((0, 0), (0, mq_pad - Mq), (0, 0)))
    q_eval = jnp.pad(eval_pts, ((0, 0), (0, me_pad - Me), (0, 0)))
    q_all = jnp.transpose(jnp.concatenate([q_loss, q_eval], axis=1), (0, 2, 1))  # (B,3,Mtot)
    gt = jnp.concatenate([input_pack['points.uni.value'].reshape(B, Nu),
                          input_pack['points.nss.value'].reshape(B, Nn)], axis=1)
    gt = jnp.pad(gt, ((0, 0), (0, mq_pad - Mq)))[:, None, :]   # (B, 1, Mq_pad)

    w_slab = pack_weights(params)                              # single (H, 256) weight DMA

    b_blk = _pick_batch_block(B)
    grid = (B // b_blk,)
    per_b = lambda i: (i, 0, 0)
    const = lambda i: (0, 0)

    err_i, occ, scl = pl.pallas_call(
        _fused_kernel,
        out_shape=(
            jax.ShapeDtypeStruct((B, 1, mq_pad), jnp.float32),  # sdf_error_i (padded)
            jax.ShapeDtypeStruct((B, 1, me_pad), jnp.float32),  # occ_hat_iou (padded)
            jax.ShapeDtypeStruct((B, 1, LANE), jnp.float32),    # per-sample scale row
        ),
        grid=grid,
        in_specs=[
            pl.BlockSpec((b_blk, 3, N), per_b),        # inputs, pre-transposed
            pl.BlockSpec((b_blk, 3, mtot), per_b),     # uni|nss|eval queries, pre-transposed
            pl.BlockSpec((b_blk, 1, mq_pad), per_b),   # gt sdf values, pre-concatenated
            pl.BlockSpec((HIDDEN, W_COLS), const),     # packed weight slab
        ],
        out_specs=(
            pl.BlockSpec((b_blk, 1, mq_pad), per_b),
            pl.BlockSpec((b_blk, 1, me_pad), per_b),
            pl.BlockSpec((b_blk, 1, LANE), per_b),
        ),
        compiler_params=pltpu.CompilerParams(dimension_semantics=("parallel",)),
    )(pcl_T, q_all, gt, w_slab)

    # ---- tiny cross-batch combine on (B, <=128) data stays in plain XLA --------
    err_flat = err_i[:, 0, :]
    uni_err_i = err_flat[:, :Nu]                               # (B, Nu)
    nss_err_i = err_flat[:, Nu:Mq]                             # (B, Nn)
    uni_loss = jnp.mean(_sdf_loss(uni_err_i))
    nss_loss = jnp.mean(_sdf_loss(nss_err_i))
    pred_scale = scl[:, 0, 0]                                  # (B,)
    loss_s = jnp.mean(jnp.abs(pred_scale - 1.0))

    output['batch_loss'] = uni_loss * W_UNI + nss_loss * W_NSS + W_S * loss_s
    # TODO(synk): w_t == 0.0 -> loss_center / error_center_i branch omitted (dead compute).
    output['loss_recon_uni'] = uni_loss
    output['loss_recon_nss'] = nss_loss
    output['metric_recon_uni_error'] = jnp.mean(uni_err_i)
    output['metric_recon_nss_error'] = jnp.mean(nss_err_i)
    output['metric_recon_uni_error_i'] = uni_err_i.reshape(-1)
    output['metric_recon_nss_error_i'] = nss_err_i.reshape(-1)
    output['loss_s'] = loss_s
    output['scale'] = pred_scale
    output['occ_hat_iou'] = occ[:, 0, :Me]
    return output


# =====================  deterministic parameter init ============================
def init_params(key, c_dim=C_DIM, hidden=HIDDEN):
    ks = jax.random.split(key, 9)
    s = 0.1
    return {
        'enc_wa': jax.random.normal(ks[0], (c_dim, 1), jnp.float32) * s,
        'enc_ba': jax.random.normal(ks[1], (c_dim, 1), jnp.float32) * s,
        'enc_w2': jax.random.normal(ks[2], (c_dim, c_dim), jnp.float32) * s,
        'enc_w3': jax.random.normal(ks[3], (c_dim, c_dim), jnp.float32) * s,
        # decoder weights stored channels-first: layer = W @ activations(C, M)
        'dec_wpf': jax.random.normal(ks[4], (hidden, c_dim), jnp.float32) * s,
        'dec_wpl': jax.random.normal(ks[5], (hidden, 1), jnp.float32) * s,
        'dec_wc': jax.random.normal(ks[6], (hidden, c_dim), jnp.float32) * s,
        'dec_b1': jnp.zeros((hidden, 1), jnp.float32),
        'dec_w1': jax.random.normal(ks[7], (hidden, hidden), jnp.float32) * s,
        'dec_b2': jnp.zeros((hidden, 1), jnp.float32),
        'dec_wo': jax.random.normal(ks[8], (1, hidden), jnp.float32) * s,
        'dec_bo': jnp.zeros((1, 1), jnp.float32),
    }


if __name__ == "__main__":
    key = jax.random.PRNGKey(0)
    B, N = 2, 128
    N_uni, N_nss, M_eval = 64, 64, 128
    k1, k2, k3, k4, k5, k6, kp = jax.random.split(key, 7)

    input_pack = {
        'phase': 'val',
        'epoch': 0,
        'inputs': jax.random.normal(k1, (B, N, 3), jnp.float32),
        'points.uni': jax.random.uniform(k2, (B, N_uni, 3), jnp.float32, -1.0, 1.0),
        'points.nss': jax.random.uniform(k3, (B, N_nss, 3), jnp.float32, -0.5, 0.5),
        'points.uni.value': jax.random.normal(k4, (B, N_uni), jnp.float32) * 0.3,
        'points.nss.value': jax.random.normal(k5, (B, N_nss), jnp.float32) * 0.1,
        'eval.points': jax.random.uniform(k6, (B, M_eval, 3), jnp.float32, -1.0, 1.0),
    }
    params = init_params(kp)

    out = sim3recon_forward(params, input_pack)
    out = jax.block_until_ready(out)

    assert out['occ_hat_iou'].shape == (B, M_eval)
    assert out['metric_recon_uni_error_i'].shape == (B * N_uni,)
    assert out['metric_recon_nss_error_i'].shape == (B * N_nss,)
    assert out['scale'].shape == (B,)
    assert jnp.isfinite(out['batch_loss'])
    print("KERNEL_OK")
</pallas_src>

<mosaic_0001>
module attributes {stable_mosaic.version = 11 : i64} {
  func.func @_fused_kernel(%arg0: i32, %arg1: memref<1x3x128xf32, #tpu.memory_space<vmem>>, %arg2: memref<1x3x256xf32, #tpu.memory_space<vmem>>, %arg3: memref<1x1x128xf32, #tpu.memory_space<vmem>>, %arg4: memref<64x256xf32, #tpu.memory_space<vmem>>, %arg5: memref<1x1x128xf32, #tpu.memory_space<vmem>>, %arg6: memref<1x1x128xf32, #tpu.memory_space<vmem>>, %arg7: memref<1x1x128xf32, #tpu.memory_space<vmem>>) attributes {dimension_semantics = [#tpu.dimension_semantics<parallel>], iteration_bounds = array<i64: 2>, scalar_prefetch = 0 : i64, scratch_operands = 0 : i64, tpu.core_type = #tpu.core_type<tc>, window_params = [{transform_indices = @transform_0, window_bounds = array<i64: 1, 3, 128>}, {transform_indices = @transform_1, window_bounds = array<i64: 1, 3, 256>}, {transform_indices = @transform_2, window_bounds = array<i64: 1, 1, 128>}, {pipeline_mode = #tpu.pipeline_mode<synchronous>, transform_indices = @transform_3, window_bounds = array<i64: 64, 256>}, {transform_indices = @transform_4, window_bounds = array<i64: 1, 1, 128>}, {transform_indices = @transform_5, window_bounds = array<i64: 1, 1, 128>}, {transform_indices = @transform_6, window_bounds = array<i64: 1, 1, 128>}]} {
    %c0 = arith.constant 0 : index
    %c0_0 = arith.constant 0 : index
    %0 = vector.load %arg4[%c0, %c0_0] : memref<64x256xf32, #tpu.memory_space<vmem>>, vector<64x256xf32>
    %1 = vector.extract_strided_slice %0 {offsets = [0, 0], sizes = [64, 64], strides = [1, 1]} : vector<64x256xf32> to vector<64x64xf32>
    %2 = vector.extract_strided_slice %0 {offsets = [0, 64], sizes = [64, 32], strides = [1, 1]} : vector<64x256xf32> to vector<64x32xf32>
    %3 = vector.extract_strided_slice %0 {offsets = [0, 96], sizes = [64, 32], strides = [1, 1]} : vector<64x256xf32> to vector<64x32xf32>
    %4 = vector.extract_strided_slice %0 {offsets = [0, 128], sizes = [32, 32], strides = [1, 1]} : vector<64x256xf32> to vector<32x32xf32>
    %5 = vector.extract_strided_slice %0 {offsets = [0, 160], sizes = [32, 32], strides = [1, 1]} : vector<64x256xf32> to vector<32x32xf32>
    %6 = vector.extract_strided_slice %0 {offsets = [0, 192], sizes = [32, 1], strides = [1, 1]} : vector<64x256xf32> to vector<32x1xf32>
    %7 = vector.extract_strided_slice %0 {offsets = [0, 193], sizes = [32, 1], strides = [1, 1]} : vector<64x256xf32> to vector<32x1xf32>
    %8 = vector.extract_strided_slice %0 {offsets = [0, 194], sizes = [64, 1], strides = [1, 1]} : vector<64x256xf32> to vector<64x1xf32>
    %9 = vector.extract_strided_slice %0 {offsets = [0, 195], sizes = [64, 1], strides = [1, 1]} : vector<64x256xf32> to vector<64x1xf32>
    %10 = vector.extract_strided_slice %0 {offsets = [0, 196], sizes = [64, 1], strides = [1, 1]} : vector<64x256xf32> to vector<64x1xf32>
    %11 = vector.extract_strided_slice %0 {offsets = [0, 197], sizes = [64, 1], strides = [1, 1]} : vector<64x256xf32> to vector<64x1xf32>
    %12 = vector.extract_strided_slice %0 {offsets = [0, 198], sizes = [1, 1], strides = [1, 1]} : vector<64x256xf32> to vector<1x1xf32>
    %c0_1 = arith.constant 0 : index
    %c0_2 = arith.constant 0 : index
    %c0_3 = arith.constant 0 : index
    %13 = vector.load %arg1[%c0_1, %c0_2, %c0_3] : memref<1x3x128xf32, #tpu.memory_space<vmem>>, vector<1x3x128xf32>
    %14 = vector.shape_cast %13 : vector<1x3x128xf32> to vector<3x128xf32>
    %cst = arith.constant dense<0.000000e+00> : vector<3xf32>
    %15 = vector.multi_reduction <add>, %14, %cst [1] : vector<3x128xf32> to vector<3xf32>
    %16 = vector.shape_cast %15 : vector<3xf32> to vector<3x1xf32>
    %cst_4 = arith.constant 1.280000e+02 : f32
    %17 = vector.broadcast %cst_4 : f32 to vector<3x1xf32>
    %18 = arith.divf %16, %17 : vector<3x1xf32>
    %19 = vector.broadcast %18 : vector<3x1xf32> to vector<3x128xf32>
    %20 = arith.subf %14, %19 : vector<3x128xf32>
    %21 = arith.mulf %20, %20 : vector<3x128xf32>
    %cst_5 = arith.constant dense<0.000000e+00> : vector<128xf32>
    %22 = vector.multi_reduction <add>, %21, %cst_5 [0] : vector<3x128xf32> to vector<128xf32>
    %23 = vector.shape_cast %22 : vector<128xf32> to vector<1x128xf32>
    %24 = vector.broadcast %6 : vector<32x1xf32> to vector<32x128xf32>
    %25 = vector.broadcast %23 : vector<1x128xf32> to vector<32x128xf32>
    %26 = arith.mulf %24, %25 : vector<32x128xf32>
    %27 = vector.broadcast %7 : vector<32x1xf32> to vector<32x128xf32>
    %28 = arith.addf %26, %27 : vector<32x128xf32>
    %cst_6 = arith.constant 0.000000e+00 : f32
    %29 = vector.broadcast %cst_6 : f32 to vector<32x128xf32>
    %30 = arith.maximumf %28, %29 : vector<32x128xf32>
    %cst_7 = arith.constant dense<0.000000e+00> : vector<32x3xf32>
    %31 = tpu.matmul %30, %20, %cst_7 {dimension_numbers = #tpu.dot_dimension_numbers<[1], [1], [0], [0], [0, 0, 1, 0], [], []>} : vector<32x128xf32>, vector<3x128xf32>, vector<32x3xf32> -> vector<32x3xf32>
    %cst_8 = arith.constant 7.812500e-03 : f32
    %32 = vector.broadcast %cst_8 : f32 to vector<32x3xf32>
    %33 = arith.mulf %31, %32 : vector<32x3xf32>
    %cst_9 = arith.constant dense<0.000000e+00> : vector<32x3xf32>
    %34 = tpu.matmul %4, %33, %cst_9 {dimension_numbers = #tpu.dot_dimension_numbers<[1], [0], [0], [1], [0, 0, 1, 1], [], []>} : vector<32x32xf32>, vector<32x3xf32>, vector<32x3xf32> -> vector<32x3xf32>
    %cst_10 = arith.constant dense<0.000000e+00> : vector<32xf32>
    %35 = vector.multi_reduction <add>, %30, %cst_10 [1] : vector<32x128xf32> to vector<32xf32>
    %36 = vector.shape_cast %35 : vector<32xf32> to vector<32x1xf32>
    %cst_11 = arith.constant 1.280000e+02 : f32
    %37 = vector.broadcast %cst_11 : f32 to vector<32x1xf32>
    %38 = arith.divf %36, %37 : vector<32x1xf32>
    %cst_12 = arith.constant dense<0.000000e+00> : vector<32x1xf32>
    %39 = tpu.matmul %5, %38, %cst_12 {dimension_numbers = #tpu.dot_dimension_numbers<[1], [0], [0], [1], [0, 0, 1, 1], [], []>} : vector<32x32xf32>, vector<32x1xf32>, vector<32x1xf32> -> vector<32x1xf32>
    %cst_13 = arith.constant 9.99999993E-9 : f32
    %40 = vector.broadcast %cst_13 : f32 to vector<1x128xf32>
    %41 = arith.addf %23, %40 : vector<1x128xf32>
    %42 = math.sqrt %41 : vector<1x128xf32>
    %cst_14 = arith.constant dense<0.000000e+00> : vector<1xf32>
    %43 = vector.multi_reduction <add>, %42, %cst_14 [1] : vector<1x128xf32> to vector<1xf32>
    %44 = vector.shape_cast %43 : vector<1xf32> to vector<1x1xf32>
    %cst_15 = arith.constant 1.280000e+02 : f32
    %45 = vector.broadcast %cst_15 : f32 to vector<1x1xf32>
    %46 = arith.divf %44, %45 : vector<1x1xf32>
    %cst_16 = arith.constant 1.000000e+00 : f32
    %47 = vector.broadcast %cst_16 : f32 to vector<1x1xf32>
    %48 = arith.mulf %47, %46 : vector<1x1xf32>
    %cst_17 = arith.constant 0.000000e+00 : f32
    %49 = vector.broadcast %cst_17 : f32 to vector<1x1xf32>
    %50 = arith.addf %48, %49 : vector<1x1xf32>
    %cst_18 = arith.constant 0.000000e+00 : f32
    %51 = vector.broadcast %cst_18 : f32 to vector<1x1xf32>
    %52 = arith.maximumf %50, %51 : vector<1x1xf32>
    %53 = vector.broadcast %cst_18 : f32 to vector<1x1xf32>
    %54 = arith.subf %50, %53 : vector<1x1xf32>
    %55 = arith.cmpf one, %54, %54 : vector<1x1xf32>
    %56 = vector.broadcast %cst_18 : f32 to vector<1x1xf32>
    %57 = arith.addf %50, %56 : vector<1x1xf32>
    %58 = math.absf %54 : vector<1x1xf32>
    %cst_19 = arith.constant 0.000000e+00 : f32
    %59 = vector.broadcast %cst_19 : f32 to vector<1x1xf32>
    %60 = arith.subf %59, %58 : vector<1x1xf32>
    %61 = math.exp %60 : vector<1x1xf32>
    %62 = math.log1p %61 : vector<1x1xf32>
    %63 = arith.addf %52, %62 : vector<1x1xf32>
    %64 = arith.select %55, %57, %63 : vector<1x1xi1>, vector<1x1xf32>
    %cst_20 = arith.constant 1.000000e+00 : f32
    %65 = vector.broadcast %cst_20 : f32 to vector<1x1xf32>
    %66 = arith.divf %65, %64 : vector<1x1xf32>
    %cst_21 = arith.constant dense<0.000000e+00> : vector<64x3xf32>
    %67 = tpu.matmul %2, %34, %cst_21 {dimension_numbers = #tpu.dot_dimension_numbers<[1], [0], [0], [1], [0, 0, 1, 1], [], []>} : vector<64x32xf32>, vector<32x3xf32>, vector<64x3xf32> -> vector<64x3xf32>
    %68 = tpu.concatenate %67, %8 in 1 : vector<64x3xf32>, vector<64x1xf32> -> vector<64x4xf32>
    %cst_22 = arith.constant dense<0.000000e+00> : vector<64x1xf32>
    %69 = tpu.matmul %3, %39, %cst_22 {dimension_numbers = #tpu.dot_dimension_numbers<[1], [0], [0], [1], [0, 0, 1, 1], [], []>} : vector<64x32xf32>, vector<32x1xf32>, vector<64x1xf32> -> vector<64x1xf32>
    %70 = arith.addf %69, %9 : vector<64x1xf32>
    %c0_23 = arith.constant 0 : index
    %c0_24 = arith.constant 0 : index
    %c0_25 = arith.constant 0 : index
    %71 = vector.load %arg2[%c0_23, %c0_24, %c0_25] : memref<1x3x256xf32, #tpu.memory_space<vmem>>, vector<1x3x256xf32>
    %72 = vector.shape_cast %71 : vector<1x3x256xf32> to vector<3x256xf32>
    %73 = vector.extract_strided_slice %72 {offsets = [0, 0], sizes = [3, 128], strides = [1, 1]} : vector<3x256xf32> to vector<3x128xf32>
    %74 = vector.broadcast %18 : vector<3x1xf32> to vector<3x128xf32>
    %75 = arith.subf %73, %74 : vector<3x128xf32>
    %76 = vector.broadcast %66 : vector<1x1xf32> to vector<3x128xf32>
    %77 = arith.mulf %75, %76 : vector<3x128xf32>
    %78 = arith.mulf %77, %77 : vector<3x128xf32>
    %cst_26 = arith.constant dense<0.000000e+00> : vector<128xf32>
    %79 = vector.multi_reduction <add>, %78, %cst_26 [0] : vector<3x128xf32> to vector<128xf32>
    %80 = vector.shape_cast %79 : vector<128xf32> to vector<1x128xf32>
    %81 = math.sqrt %80 : vector<1x128xf32>
    %82 = tpu.concatenate %77, %81 in 0 : vector<3x128xf32>, vector<1x128xf32> -> vector<4x128xf32>
    %cst_27 = arith.constant dense<0.000000e+00> : vector<64x128xf32>
    %83 = tpu.matmul %68, %82, %cst_27 {dimension_numbers = #tpu.dot_dimension_numbers<[1], [0], [0], [1], [0, 0, 1, 1], [], []>} : vector<64x4xf32>, vector<4x128xf32>, vector<64x128xf32> -> vector<64x128xf32>
    %84 = vector.broadcast %70 : vector<64x1xf32> to vector<64x128xf32>
    %85 = arith.addf %83, %84 : vector<64x128xf32>
    %cst_28 = arith.constant 0.000000e+00 : f32
    %86 = vector.broadcast %cst_28 : f32 to vector<64x128xf32>
    %87 = arith.maximumf %85, %86 : vector<64x128xf32>
    %cst_29 = arith.constant dense<0.000000e+00> : vector<64x128xf32>
    %88 = tpu.matmul %1, %87, %cst_29 {dimension_numbers = #tpu.dot_dimension_numbers<[1], [0], [0], [1], [0, 0, 1, 1], [], []>} : vector<64x64xf32>, vector<64x128xf32>, vector<64x128xf32> -> vector<64x128xf32>
    %89 = vector.broadcast %10 : vector<64x1xf32> to vector<64x128xf32>
    %90 = arith.addf %88, %89 : vector<64x128xf32>
    %cst_30 = arith.constant 0.000000e+00 : f32
    %91 = vector.broadcast %cst_30 : f32 to vector<64x128xf32>
    %92 = arith.maximumf %90, %91 : vector<64x128xf32>
    %93 = vector.broadcast %11 : vector<64x1xf32> to vector<64x128xf32>
    %94 = arith.mulf %92, %93 : vector<64x128xf32>
    %cst_31 = arith.constant dense<0.000000e+00> : vector<128xf32>
    %95 = vector.multi_reduction <add>, %94, %cst_31 [0] : vector<64x128xf32> to vector<128xf32>
    %96 = vector.shape_cast %95 : vector<128xf32> to vector<1x128xf32>
    %97 = vector.broadcast %12 : vector<1x1xf32> to vector<1x128xf32>
    %98 = arith.addf %96, %97 : vector<1x128xf32>
    %99 = vector.extract_strided_slice %72 {offsets = [0, 128], sizes = [3, 128], strides = [1, 1]} : vector<3x256xf32> to vector<3x128xf32>
    %100 = vector.broadcast %18 : vector<3x1xf32> to vector<3x128xf32>
    %101 = arith.subf %99, %100 : vector<3x128xf32>
    %102 = vector.broadcast %66 : vector<1x1xf32> to vector<3x128xf32>
    %103 = arith.mulf %101, %102 : vector<3x128xf32>
    %104 = arith.mulf %103, %103 : vector<3x128xf32>
    %cst_32 = arith.constant dense<0.000000e+00> : vector<128xf32>
    %105 = vector.multi_reduction <add>, %104, %cst_32 [0] : vector<3x128xf32> to vector<128xf32>
    %106 = vector.shape_cast %105 : vector<128xf32> to vector<1x128xf32>
    %107 = math.sqrt %106 : vector<1x128xf32>
    %108 = tpu.concatenate %103, %107 in 0 : vector<3x128xf32>, vector<1x128xf32> -> vector<4x128xf32>
    %cst_33 = arith.constant dense<0.000000e+00> : vector<64x128xf32>
    %109 = tpu.matmul %68, %108, %cst_33 {dimension_numbers = #tpu.dot_dimension_numbers<[1], [0], [0], [1], [0, 0, 1, 1], [], []>} : vector<64x4xf32>, vector<4x128xf32>, vector<64x128xf32> -> vector<64x128xf32>
    %110 = vector.broadcast %70 : vector<64x1xf32> to vector<64x128xf32>
    %111 = arith.addf %109, %110 : vector<64x128xf32>
    %cst_34 = arith.constant 0.000000e+00 : f32
    %112 = vector.broadcast %cst_34 : f32 to vector<64x128xf32>
    %113 = arith.maximumf %111, %112 : vector<64x128xf32>
    %cst_35 = arith.constant dense<0.000000e+00> : vector<64x128xf32>
    %114 = tpu.matmul %1, %113, %cst_35 {dimension_numbers = #tpu.dot_dimension_numbers<[1], [0], [0], [1], [0, 0, 1, 1], [], []>} : vector<64x64xf32>, vector<64x128xf32>, vector<64x128xf32> -> vector<64x128xf32>
    %115 = vector.broadcast %10 : vector<64x1xf32> to vector<64x128xf32>
    %116 = arith.addf %114, %115 : vector<64x128xf32>
    %cst_36 = arith.constant 0.000000e+00 : f32
    %117 = vector.broadcast %cst_36 : f32 to vector<64x128xf32>
    %118 = arith.maximumf %116, %117 : vector<64x128xf32>
    %119 = vector.broadcast %11 : vector<64x1xf32> to vector<64x128xf32>
    %120 = arith.mulf %118, %119 : vector<64x128xf32>
    %cst_37 = arith.constant dense<0.000000e+00> : vector<128xf32>
    %121 = vector.multi_reduction <add>, %120, %cst_37 [0] : vector<64x128xf32> to vector<128xf32>
    %122 = vector.shape_cast %121 : vector<128xf32> to vector<1x128xf32>
    %123 = vector.broadcast %12 : vector<1x1xf32> to vector<1x128xf32>
    %124 = arith.addf %122, %123 : vector<1x128xf32>
    %c0_38 = arith.constant 0 : index
    %c0_39 = arith.constant 0 : index
    %c0_40 = arith.constant 0 : index
    %125 = vector.load %arg3[%c0_38, %c0_39, %c0_40] : memref<1x1x128xf32, #tpu.memory_space<vmem>>, vector<1x1x128xf32>
    %126 = vector.shape_cast %125 : vector<1x1x128xf32> to vector<1x128xf32>
    %127 = arith.subf %98, %126 : vector<1x128xf32>
    %128 = math.absf %127 : vector<1x128xf32>
    %c0_41 = arith.constant 0 : index
    %c0_42 = arith.constant 0 : index
    %c0_43 = arith.constant 0 : index
    %129 = vector.load %arg5[%c0_41, %c0_42, %c0_43] : memref<1x1x128xf32, #tpu.memory_space<vmem>>, vector<1x1x128xf32>
    %130 = vector.shape_cast %129 : vector<1x1x128xf32> to vector<1x128xf32>
    %131 = vector.shape_cast %128 : vector<1x128xf32> to vector<1x1x128xf32>
    tpu.vector_store %arg5[%c0_41, %c0_42, %c0_43], %131 {strides = array<i32>} : memref<1x1x128xf32, #tpu.memory_space<vmem>>, vector<1x1x128xf32>,
    %cst_44 = arith.constant -1.000000e+00 : f32
    %132 = vector.broadcast %cst_44 : f32 to vector<1x128xf32>
    %133 = arith.mulf %132, %124 : vector<1x128xf32>
    %134 = arith.negf %133 : vector<1x128xf32>
    %135 = math.exp %134 : vector<1x128xf32>
    %cst_45 = arith.constant 1.000000e+00 : f32
    %136 = vector.broadcast %cst_45 : f32 to vector<1x128xf32>
    %137 = arith.addf %136, %135 : vector<1x128xf32>
    %138 = arith.divf %136, %137 : vector<1x128xf32>
    %c0_46 = arith.constant 0 : index
    %c0_47 = arith.constant 0 : index
    %c0_48 = arith.constant 0 : index
    %139 = vector.load %arg6[%c0_46, %c0_47, %c0_48] : memref<1x1x128xf32, #tpu.memory_space<vmem>>, vector<1x1x128xf32>
    %140 = vector.shape_cast %139 : vector<1x1x128xf32> to vector<1x128xf32>
    %141 = vector.shape_cast %138 : vector<1x128xf32> to vector<1x1x128xf32>
    tpu.vector_store %arg6[%c0_46, %c0_47, %c0_48], %141 {strides = array<i32>} : memref<1x1x128xf32, #tpu.memory_space<vmem>>, vector<1x1x128xf32>,
    %142 = vector.shape_cast %64 : vector<1x1xf32> to vector<1x1xf32>
    %143 = vector.broadcast %142 : vector<1x1xf32> to vector<1x128xf32>
    %c0_49 = arith.constant 0 : index
    %c0_50 = arith.constant 0 : index
    %c0_51 = arith.constant 0 : index
    %144 = vector.load %arg7[%c0_49, %c0_50, %c0_51] : memref<1x1x128xf32, #tpu.memory_space<vmem>>, vector<1x1x128xf32>
    %145 = vector.shape_cast %144 : vector<1x1x128xf32> to vector<1x128xf32>
    %146 = vector.shape_cast %143 : vector<1x128xf32> to vector<1x1x128xf32>
    tpu.vector_store %arg7[%c0_49, %c0_50, %c0_51], %146 {strides = array<i32>} : memref<1x1x128xf32, #tpu.memory_space<vmem>>, vector<1x1x128xf32>,
    return
  }
  func.func @transform_0(%arg0: i32) -> (i32, i32, i32) {
    %c0_i32 = arith.constant 0 : i32
    %c0_i32_0 = arith.constant 0 : i32
    %c0_i32_1 = arith.constant 0 : i32
    return %arg0, %c0_i32, %c0_i32_0 : i32, i32, i32
  }
  func.func @transform_1(%arg0: i32) -> (i32, i32, i32) {
    %c0_i32 = arith.constant 0 : i32
    %c0_i32_0 = arith.constant 0 : i32
    %c0_i32_1 = arith.constant 0 : i32
    return %arg0, %c0_i32, %c0_i32_0 : i32, i32, i32
  }
  func.func @transform_2(%arg0: i32) -> (i32, i32, i32) {
    %c0_i32 = arith.constant 0 : i32
    %c0_i32_0 = arith.constant 0 : i32
    %c0_i32_1 = arith.constant 0 : i32
    return %arg0, %c0_i32, %c0_i32_0 : i32, i32, i32
  }
  func.func @transform_3(%arg0: i32) -> (i32, i32) {
    %c0_i32 = arith.constant 0 : i32
    %c0_i32_0 = arith.constant 0 : i32
    %c0_i32_1 = arith.constant 0 : i32
    return %c0_i32, %c0_i32_0 : i32, i32
  }
  func.func @transform_4(%arg0: i32) -> (i32, i32, i32) {
    %c0_i32 = arith.constant 0 : i32
    %c0_i32_0 = arith.constant 0 : i32
    %c0_i32_1 = arith.constant 0 : i32
    return %arg0, %c0_i32, %c0_i32_0 : i32, i32, i32
  }
  func.func @transform_5(%arg0: i32) -> (i32, i32, i32) {
    %c0_i32 = arith.constant 0 : i32
    %c0_i32_0 = arith.constant 0 : i32
    %c0_i32_1 = arith.constant 0 : i32
    return %arg0, %c0_i32, %c0_i32_0 : i32, i32, i32
  }
  func.func @transform_6(%arg0: i32) -> (i32, i32, i32) {
    %c0_i32 = arith.constant 0 : i32
    %c0_i32_0 = arith.constant 0 : i32
    %c0_i32_1 = arith.constant 0 : i32
    return %arg0, %c0_i32, %c0_i32_0 : i32, i32, i32
  }
}

</mosaic_0001>

<llo_original>
// kernel: tpu_custom_call.1
$region0: #{tpu_custom_call.1}
  #allocation0 [shape = 'u32[]', space=smem, size = 0x4, offset = 0x4, fixed_abs, tag = 'smem constant byte address 0x4 - core index']
  #allocation1 [shape = 'u32[144,128]{1,0:T(1,128)}', space=vmem, size = 0x12000, scoped, tag = 'internal scratch']
  %s0 = inlined_call_operand.vmem [shape: f32[2,3,128], index: 0, kind: input, shape index: {}]
  %s1 = inlined_call_operand.vmem [shape: f32[2,3,256], index: 1, kind: input, shape index: {}]
  %s2 = inlined_call_operand.vmem [shape: f32[2,1,128], index: 2, kind: input, shape index: {}]
  %s3 = inlined_call_operand.hbm [shape: f32[64,256], index: 3, kind: input, shape index: {}]
  %s4 = inlined_call_operand.hbm [shape: f32[2,1,128], index: 4, kind: output, shape index: {0}]
  %s5 = inlined_call_operand.hbm [shape: f32[2,1,128], index: 5, kind: output, shape index: {1}]
  %s6 = inlined_call_operand.hbm [shape: f32[2,1,128], index: 6, kind: output, shape index: {2}]
  %7 = xla_tuple %s4, %s5, %s6
  %s8 = sld [smem:[#allocation0]]
  $region69: #{tpu_custom_call.1} parent=0
    _
  %s10 = ssub.s32 1, %s8
  %s11 = scalar_select 0, %s10, %s8
  $region1: #{tpu_custom_call.1} parent=0
    #allocation2 [shape = 'u8[65536]{0}', space=vmem, size = 0x10000, scoped, tag = 'input window, operand 3, single buffered']
    #allocation3 [shape = 's32[2]{0}', space=sflag, size = 0x8, scoped, tag = 'scoped memory for tpu_custom_call.1']
    #allocation4 [shape = 's32[2]{0}', space=sflag, size = 0x8, scoped, tag = 'scoped memory for tpu_custom_call.1']
    #allocation5 [shape = 'u8[1024]{0}', space=vmem, size = 0x400, scoped, tag = 'output window, operand 0']
    #allocation6 [shape = 'u8[1024]{0}', space=vmem, size = 0x400, scoped, tag = 'output window, operand 1']
    #allocation7 [shape = 's32[2]{0}', space=sflag, size = 0x8, scoped, tag = 'scoped memory for tpu_custom_call.1']
    #allocation8 [shape = 'u8[1024]{0}', space=vmem, size = 0x400, scoped, tag = 'output window, operand 2']
    %12 = vsyncpa [#allocation3], 0
    %13 = vsyncpa [#allocation4], 0
    %s14 = scalar_lea.sflag [#allocation4], 1
    %15 = vsyncpa %s14, 0
    %16 = vsyncpa [#allocation7], 0
    %s17 = scalar_lea.sflag [#allocation7], 1
    %18 = vsyncpa %s17, 0
    loop: start=0, step=1, limit=4
    $region2: #{tpu_custom_call.1} parent=1 // loop_pre_header
      _
    $region3: #{tpu_custom_call.1} parent=1 // loop_header
      %s20 = sphi 0, %s24
      %p21 = scmp.ge.s32.totalorder %s20, 4
      %s30 = sphi 0, %s32
      %s33 = sphi 0, %s30
      %s34 = sphi 0, %s33
      %s50 = sphi 0, %s34
      %s56 = sphi 0, %s58
      %s59 = sphi 0, %s56
      %s60 = sphi 0, %s59
      %s76 = sphi 0, %s60
      %s82 = sphi 0, %s84
      %s85 = sphi 0, %s82
      %s86 = sphi 0, %s85
      %s102 = sphi 0, %s86
      %s106 = sphi 0, %s106
      %s108 = sphi 0, %s106
      %s109 = sphi 0, %s108
      %s123 = sphi 0, %s109
      %s129 = sphi 0, %s131
      %s132 = sphi 0, %s129
      %s133 = sphi 0, %s132
      %s149 = sphi 0, %s133
      %s155 = sphi 0, %s157
      %s158 = sphi 0, %s155
      %s159 = sphi 0, %s158
      %s175 = sphi 0, %s159
      %s181 = sphi 0, %s183
      %s184 = sphi 0, %s181
      %s185 = sphi 0, %s184
      %s201 = sphi 0, %s185
    $region4: #{tpu_custom_call.1} parent=1 // loop_header_branch
      %23 = sbr.rel (%p21) target = $region8
    $region5: #{tpu_custom_call.1} parent=1 // loop_body
      %s25 = ssub.s32 %s20, 1
      %s26 = ssub.s32 %s20, 2
      %s27 = sadd.s32 %s20, 1
      %s28 = ssub.s32 %s20, %s27
      %p29 = scmp.eq.s32.totalorder %s28, 0
      %s31 = sadd.s32 %s30, 1
      %s32 = scalar_select %p29, %s30, %s31
      %p35 = pneg %p29
      %p36 = scmp.eq.s32.totalorder %s20, 1
      %p37 = por %p35, %p36
      %p38 = scmp.ne.s32.totalorder %s30, %s33
      %p39 = scmp.eq.s32.totalorder %s20, 0
      %p40 = por %p38, %p39
      %p41 = scmp.ne.s32.totalorder %s30, %s33
      %p42 = scmp.eq.s32.totalorder %s25, 1
      %p43 = por %p41, %p42
      %p44 = scmp.ne.s32.totalorder %s33, %s34
      %p45 = scmp.eq.s32.totalorder %s25, 0
      %p46 = por %p44, %p45
      %p47 = scmp.ne.s32.totalorder %s33, %s34
      %p48 = scmp.eq.s32.totalorder %s26, 1
      %p49 = por %p47, %p48
      %p51 = scmp.ne.s32.totalorder %s34, %s50
      %p52 = scmp.eq.s32.totalorder %s26, 0
      %p53 = por %p51, %p52
      %s54 = ssub.s32 %s20, %s27
      %p55 = scmp.eq.s32.totalorder %s54, 0
      %s57 = sadd.s32 %s56, 1
      %s58 = scalar_select %p55, %s56, %s57
      %p61 = pneg %p55
      %p62 = scmp.eq.s32.totalorder %s20, 1
      %p63 = por %p61, %p62
      %p64 = scmp.ne.s32.totalorder %s56, %s59
      %p65 = scmp.eq.s32.totalorder %s20, 0
      %p66 = por %p64, %p65
      %p67 = scmp.ne.s32.totalorder %s56, %s59
      %p68 = scmp.eq.s32.totalorder %s25, 1
      %p69 = por %p67, %p68
      %p70 = scmp.ne.s32.totalorder %s59, %s60
      %p71 = scmp.eq.s32.totalorder %s25, 0
      %p72 = por %p70, %p71
      %p73 = scmp.ne.s32.totalorder %s59, %s60
      %p74 = scmp.eq.s32.totalorder %s26, 1
      %p75 = por %p73, %p74
      %p77 = scmp.ne.s32.totalorder %s60, %s76
      %p78 = scmp.eq.s32.totalorder %s26, 0
      %p79 = por %p77, %p78
      %s80 = ssub.s32 %s20, %s27
      %p81 = scmp.eq.s32.totalorder %s80, 0
      %s83 = sadd.s32 %s82, 1
      %s84 = scalar_select %p81, %s82, %s83
      %p87 = pneg %p81
      %p88 = scmp.eq.s32.totalorder %s20, 1
      %p89 = por %p87, %p88
      %p90 = scmp.ne.s32.totalorder %s82, %s85
      %p91 = scmp.eq.s32.totalorder %s20, 0
      %p92 = por %p90, %p91
      %p93 = scmp.ne.s32.totalorder %s82, %s85
      %p94 = scmp.eq.s32.totalorder %s25, 1
      %p95 = por %p93, %p94
      %p96 = scmp.ne.s32.totalorder %s85, %s86
      %p97 = scmp.eq.s32.totalorder %s25, 0
      %p98 = por %p96, %p97
      %p99 = scmp.ne.s32.totalorder %s85, %s86
      %p100 = scmp.eq.s32.totalorder %s26, 1
      %p101 = por %p99, %p100
      %p103 = scmp.ne.s32.totalorder %s86, %s102
      %p104 = scmp.eq.s32.totalorder %s26, 0
      %p105 = por %p103, %p104
      %s107 = sadd.s32 %s106, 1
      %p110 = scmp.eq.s32.totalorder %s20, 1
      %p111 = scmp.ne.s32.totalorder %s106, %s108
      %p112 = scmp.eq.s32.totalorder %s20, 0
      %p113 = por %p111, %p112
      %p114 = scmp.ne.s32.totalorder %s106, %s108
      %p115 = scmp.eq.s32.totalorder %s25, 1
      %p116 = por %p114, %p115
      %p117 = scmp.ne.s32.totalorder %s108, %s109
      %p118 = scmp.eq.s32.totalorder %s25, 0
      %p119 = por %p117, %p118
      %p120 = scmp.ne.s32.totalorder %s108, %s109
      %p121 = scmp.eq.s32.totalorder %s26, 1
      %p122 = por %p120, %p121
      %p124 = scmp.ne.s32.totalorder %s109, %s123
      %p125 = scmp.eq.s32.totalorder %s26, 0
      %p126 = por %p124, %p125
      %s127 = ssub.s32 %s20, %s27
      %p128 = scmp.eq.s32.totalorder %s127, 0
      %s130 = sadd.s32 %s129, 1
      %s131 = scalar_select %p128, %s129, %s130
      %p134 = pneg %p128
      %p135 = scmp.eq.s32.totalorder %s20, 1
      %p136 = por %p134, %p135
      %p137 = scmp.ne.s32.totalorder %s129, %s132
      %p138 = scmp.eq.s32.totalorder %s20, 0
      %p139 = por %p137, %p138
      %p140 = scmp.ne.s32.totalorder %s129, %s132
      %p141 = scmp.eq.s32.totalorder %s25, 1
      %p142 = por %p140, %p141
      %p143 = scmp.ne.s32.totalorder %s132, %s133
      %p144 = scmp.eq.s32.totalorder %s25, 0
      %p145 = por %p143, %p144
      %p146 = scmp.ne.s32.totalorder %s132, %s133
      %p147 = scmp.eq.s32.totalorder %s26, 1
      %p148 = por %p146, %p147
      %p150 = scmp.ne.s32.totalorder %s133, %s149
      %p151 = scmp.eq.s32.totalorder %s26, 0
      %p152 = por %p150, %p151
      %s153 = ssub.s32 %s20, %s27
      %p154 = scmp.eq.s32.totalorder %s153, 0
      %s156 = sadd.s32 %s155, 1
      %s157 = scalar_select %p154, %s155, %s156
      %p160 = pneg %p154
      %p161 = scmp.eq.s32.totalorder %s20, 1
      %p162 = por %p160, %p161
      %p163 = scmp.ne.s32.totalorder %s155, %s158
      %p164 = scmp.eq.s32.totalorder %s20, 0
      %p165 = por %p163, %p164
      %p166 = scmp.ne.s32.totalorder %s155, %s158
      %p167 = scmp.eq.s32.totalorder %s25, 1
      %p168 = por %p166, %p167
      %p169 = scmp.ne.s32.totalorder %s158, %s159
      %p170 = scmp.eq.s32.totalorder %s25, 0
      %p171 = por %p169, %p170
      %p172 = scmp.ne.s32.totalorder %s158, %s159
      %p173 = scmp.eq.s32.totalorder %s26, 1
      %p174 = por %p172, %p173
      %p176 = scmp.ne.s32.totalorder %s159, %s175
      %p177 = scmp.eq.s32.totalorder %s26, 0
      %p178 = por %p176, %p177
      %s179 = ssub.s32 %s20, %s27
      %p180 = scmp.eq.s32.totalorder %s179, 0
      %s182 = sadd.s32 %s181, 1
      %s183 = scalar_select %p180, %s181, %s182
      %p186 = pneg %p180
      %p187 = scmp.eq.s32.totalorder %s20, 1
      %p188 = por %p186, %p187
      %p189 = scmp.ne.s32.totalorder %s181, %s184
      %p190 = scmp.eq.s32.totalorder %s20, 0
      %p191 = por %p189, %p190
      %p192 = scmp.ne.s32.totalorder %s181, %s184
      %p193 = scmp.eq.s32.totalorder %s25, 1
      %p194 = por %p192, %p193
      %p195 = scmp.ne.s32.totalorder %s184, %s185
      %p196 = scmp.eq.s32.totalorder %s25, 0
      %p197 = por %p195, %p196
      %p198 = scmp.ne.s32.totalorder %s184, %s185
      %p199 = scmp.eq.s32.totalorder %s26, 1
      %p200 = por %p198, %p199
      %p202 = scmp.ne.s32.totalorder %s185, %s201
      %p203 = scmp.eq.s32.totalorder %s26, 0
      %p204 = por %p202, %p203
      %p205 = scmp.le.s32.totalorder 1, %s20
      %p206 = scmp.lt.s32.totalorder %s20, 3
      %p207 = pnand %p205, %p206
      %p208 = pneg %p207
      // Predicated region
      $region9: #{tpu_custom_call.1} parent=5 // pred_check
        _
      $region10: #{tpu_custom_call.1} parent=5 // pred_check_branch
        %210 = sbr.rel (%p207) target = $region12
      $region11: #{tpu_custom_call.1} parent=5 // pred_region
        %s211 = ssub.s32 %s20, 1
        // Predicated region
        $region13: #{tpu_custom_call.1} parent=11 // pred_check
          %p212 = pneg %p119
        $region14: #{tpu_custom_call.1} parent=11 // pred_check_branch
          %214 = sbr.rel (%p212) target = $region16
        $region15: #{tpu_custom_call.1} parent=11 // pred_region
          %s216 = ssub.s32 2048, 2048
          %217 = vsyncadd [#allocation3], %s216
          %s218 = sshll.u32 [#allocation2], 4
          %s219 = int_to_ptr.vmem [resolvable:$true] %s218
          %224 = dma.hbm_to_vmem [thread:$0]  %s3, 2048, %s219, [#allocation3], 256, 256, 16
        $region16: #{tpu_custom_call.1} parent=11 // pred_fallthru
          _
      $region12: #{tpu_custom_call.1} parent=5 // pred_fallthru
        _
      %p225 = scmp.lt.s32.totalorder %s20, 2
      // Predicated region
      $region17: #{tpu_custom_call.1} parent=5 // pred_check
        %p226 = pneg %p225
      $region18: #{tpu_custom_call.1} parent=5 // pred_check_branch
        %228 = sbr.rel (%p226) target = $region20
      $region19: #{tpu_custom_call.1} parent=5 // pred_region
        // Predicated region
        $region21: #{tpu_custom_call.1} parent=19 // pred_check
          %p229 = pneg %p40
        $region22: #{tpu_custom_call.1} parent=19 // pred_check_branch
          %231 = sbr.rel (%p229) target = $region24
        $region23: #{tpu_custom_call.1} parent=19 // pred_region
          %p232 = scmp.lt.s32.totalorder %s20, 1
          %s233 = scalar_select %p232, %s20, 1
          %s234 = smul.addr %s233, 4
          %s235 = scalar_lea.vmem %s0, %s234
        $region24: #{tpu_custom_call.1} parent=19 // pred_fallthru
          _
        // Predicated region
        $region25: #{tpu_custom_call.1} parent=19 // pred_check
          %p236 = pneg %p66
        $region26: #{tpu_custom_call.1} parent=19 // pred_check_branch
          %238 = sbr.rel (%p236) target = $region28
        $region27: #{tpu_custom_call.1} parent=19 // pred_region
          %p239 = scmp.lt.s32.totalorder %s20, 1
          %s240 = scalar_select %p239, %s20, 1
          %s241 = smul.addr %s240, 2
          %s242 = smul.addr %s241, 4
          %s243 = scalar_lea.vmem %s1, %s242
        $region28: #{tpu_custom_call.1} parent=19 // pred_fallthru
          _
        // Predicated region
        $region29: #{tpu_custom_call.1} parent=19 // pred_check
          %p244 = pneg %p92
        $region30: #{tpu_custom_call.1} parent=19 // pred_check_branch
          %246 = sbr.rel (%p244) target = $region32
        $region31: #{tpu_custom_call.1} parent=19 // pred_region
          %p247 = scmp.lt.s32.totalorder %s20, 1
          %s248 = scalar_select %p247, %s20, 1
          %s249 = scalar_lea.vmem %s2, %s248
        $region32: #{tpu_custom_call.1} parent=19 // pred_fallthru
          _
      $region20: #{tpu_custom_call.1} parent=5 // pred_fallthru
        _
      %p250 = scmp.le.s32.totalorder 1, %s20
      %p251 = scmp.lt.s32.totalorder %s20, 3
      %p252 = pnand %p250, %p251
      %p253 = pneg %p252
      // Predicated region
      $region33: #{tpu_custom_call.1} parent=5 // pred_check
        _
      $region34: #{tpu_custom_call.1} parent=5 // pred_check_branch
        %255 = sbr.rel (%p252) target = $region36
      $region35: #{tpu_custom_call.1} parent=5 // pred_region
        %s256 = ssub.s32 %s20, 1
        // Predicated region
        $region37: #{tpu_custom_call.1} parent=35 // pred_check
          %p257 = pneg %p119
        $region38: #{tpu_custom_call.1} parent=35 // pred_check_branch
          %259 = sbr.rel (%p257) target = $region40
        $region39: #{tpu_custom_call.1} parent=35 // pred_region
          %260 = dma.done [#allocation3], 2048
        $region40: #{tpu_custom_call.1} parent=35 // pred_fallthru
          _
        %p261 = scmp.lt.s32.totalorder %s25, 1
        %s262 = scalar_select %p261, %s25, 1
        %s263 = smul.addr %s262, 4
        %s264 = scalar_lea.vmem %s0, %s263
        %p265 = pneg %p46
        %p266 = pneg %p43
        %p267 = scmp.lt.s32.totalorder %s25, 1
        %s268 = scalar_select %p267, %s25, 1
        %s269 = smul.addr %s268, 2
        %s270 = smul.addr %s269, 4
        %s271 = scalar_lea.vmem %s1, %s270
        %p272 = pneg %p72
        %p273 = pneg %p69
        %p274 = scmp.lt.s32.totalorder %s25, 1
        %s275 = scalar_select %p274, %s25, 1
        %s276 = scalar_lea.vmem %s2, %s275
        %p277 = pneg %p98
        %p278 = pneg %p95
        %p279 = pneg %p119
        %p280 = pneg %p116
        %p281 = pneg %p145
        %p282 = pneg %p142
        %s283 = sand.u32 %s132, 1
        %s284 = scalar_lea.sflag [#allocation4], %s283
        %s285 = sand.u32 %s132, 1
        %s286 = scalar_lea.vmem [#allocation5], %s285
        %p287 = pneg %p171
        %p288 = pneg %p168
        %s289 = sand.u32 %s25, 1
        %s290 = scalar_lea.sflag [#allocation7], %s289
        %s291 = sand.u32 %s158, 1
        %s292 = scalar_lea.vmem [#allocation6], %s291
        %p293 = pneg %p197
        %p294 = pneg %p194
        %s295 = sand.u32 %s25, 1
        %s296 = scalar_lea.sflag [#allocation7], %s295
        %s297 = sand.u32 %s184, 1
        %s298 = scalar_lea.vmem [#allocation8], %s297
        %p299 = scmp.lt.s32.totalorder %s25, 1
        %s300 = scalar_select %p299, %s25, 1
        %s301 = smul.addr %s300, 4
        %s302 = scalar_lea.vmem %s0, %s301
        %p303 = scmp.lt.s32.totalorder %s25, 1
        %s304 = scalar_select %p303, %s25, 1
        %s305 = smul.addr %s304, 2
        %s306 = smul.addr %s305, 4
        %s307 = scalar_lea.vmem %s1, %s306
        %p308 = scmp.lt.s32.totalorder %s25, 1
        %s309 = scalar_select %p308, %s25, 1
        %s310 = scalar_lea.vmem %s2, %s309
        %v311 = vld [vmem:[#allocation2] sm:$0xff]
        %v312 = vld [vmem:[#allocation2 + $0x8] sm:$0xff]
        %v313 = vld [vmem:[#allocation2 + $0x10] sm:$0xff]
        %v314 = vld [vmem:[#allocation2 + $0x18] sm:$0xff]
        %v315 = vld [vmem:[#allocation2 + $0x20] sm:$0xff]
        %v316 = vld [vmem:[#allocation2 + $0x28] sm:$0xff]
        %v317 = vld [vmem:[#allocation2 + $0x30] sm:$0xff]
        %v318 = vld [vmem:[#allocation2 + $0x38] sm:$0xff]
        %v319 = vld [vmem:[#allocation2 + $0x40] sm:$0xff]
        %v320 = vld [vmem:[#allocation2 + $0x48] sm:$0xff]
        %v321 = vld [vmem:[#allocation2 + $0x50] sm:$0xff]
        %v322 = vld [vmem:[#allocation2 + $0x58] sm:$0xff]
        %v323 = vld [vmem:[#allocation2 + $0x60] sm:$0xff]
        %v324 = vld [vmem:[#allocation2 + $0x68] sm:$0xff]
        %v325 = vld [vmem:[#allocation2 + $0x70] sm:$0xff]
        %v326 = vld [vmem:[#allocation2 + $0x78] sm:$0xff]
        %v327 = vld [vmem:[%s302] sm:$0x7]
        %vm328 = vcmask 1042432
        %v329 = vsel %vm328, %v327, 0.0
        %330 = vadd.xlane.f32.xlu0 %v329
        %v331 = vpop.xlane.xlu0 %330
        %v332 = vrcp.pop 128.0
        %v333 = vmul.f32 %v331, %v332
        %v334 = vsub.f32 %v327, %v333
        %v335 = vmul.f32 %v334, %v334
        %v336 = vsel %vm328, %v335, 0.0
        %v337 = vrot.slane %v336, 4
        %v338 = vadd.f32 %v336, %v337
        %v339 = vrot.slane %v338, 2
        %v340 = vadd.f32 %v338, %v339
        %v341 = vrot.slane %v340, 1
        %v342 = vadd.f32 %v340, %v341
        %344 = vset.pattern.permute.xlu0 64
        %345 = vperm.xlu0 %344, %v312
        %v346 = vpop.permute.xlu0 %345
        %349 = vset.pattern.permute.xlu0 64
        %350 = vperm.xlu0 %349, %v314
        %v351 = vpop.permute.xlu0 %350
        %354 = vset.pattern.permute.xlu0 64
        %355 = vperm.xlu0 %354, %v316
        %v356 = vpop.permute.xlu0 %355
        %359 = vset.pattern.permute.xlu0 64
        %360 = vperm.xlu0 %359, %v318
        %v361 = vpop.permute.xlu0 %360
        %v363 = vmul.f32 %v346, %v342
        %v364 = vmul.f32 %v351, %v342
        %v365 = vmul.f32 %v356, %v342
        %v366 = vmul.f32 %v361, %v342
        %367 = vset.pattern.permute.xlu0 65
        %368 = vperm.xlu0 %367, %v312
        %v369 = vpop.permute.xlu0 %368
        %371 = vset.pattern.permute.xlu0 65
        %372 = vperm.xlu0 %371, %v314
        %v373 = vpop.permute.xlu0 %372
        %375 = vset.pattern.permute.xlu0 65
        %376 = vperm.xlu0 %375, %v316
        %v377 = vpop.permute.xlu0 %376
        %379 = vset.pattern.permute.xlu0 65
        %380 = vperm.xlu0 %379, %v318
        %v381 = vpop.permute.xlu0 %380
        %v383 = vadd.f32 %v363, %v369
        %v384 = vadd.f32 %v364, %v373
        %v385 = vadd.f32 %v365, %v377
        %v386 = vadd.f32 %v366, %v381
        %v387 = vmax.f32 %v383, 0.0
        %v388 = vmax.f32 %v384, 0.0
        %v389 = vmax.f32 %v385, 0.0
        %v390 = vmax.f32 %v386, 0.0
        %391 = vmatprep.subr.mxu0 0.0
        %392 = vmatpush1.xpose.msra.mxu0 0.0
        %393 = vmatprep.subr.mxu0 0.0
        %394 = vmatpush1.xpose.msra.mxu0 0.0
        %395 = vmatprep.subr.mxu0 0.0
        %396 = vmatpush1.xpose.msra.mxu0 0.0
        %397 = vmatprep.subr.mxu0 0.0
        %398 = vmatpush1.xpose.msra.mxu0 0.0
        %399 = vmatprep.subr.mxu0 0.0
        %400 = vmatpush1.xpose.msra.mxu0 0.0
        %401 = vmatprep.subr.mxu0 0.0
        %402 = vmatpush1.xpose.msra.mxu0 0.0
        %403 = vmatprep.subr.mxu0 0.0
        %404 = vmatpush1.xpose.msra.mxu0 0.0
        %405 = vmatprep.subr.mxu0 0.0
        %406 = vmatpush1.xpose.msra.mxu0 0.0
        %407 = vmatprep.subr.mxu0 0.0
        %408 = vmatpush1.xpose.msra.mxu0 0.0
        %409 = vmatprep.subr.mxu0 0.0
        %410 = vmatpush1.xpose.msra.mxu0 0.0
        %411 = vmatprep.subr.mxu0 0.0
        %412 = vmatpush1.xpose.msra.mxu0 0.0
        %413 = vmatprep.subr.mxu0 0.0
        %414 = vmatpush1.xpose.msra.mxu0 0.0
        %415 = vmatprep.subr.mxu0 0.0
        %416 = vmatpush1.xpose.msra.mxu0 0.0
        %417 = vmatprep.subr.mxu0 0.0
        %418 = vmatpush1.xpose.msra.mxu0 0.0
        %419 = vmatprep.subr.mxu0 0.0
        %420 = vmatpush1.xpose.msra.mxu0 0.0
        %421 = vmatprep.subr.mxu0 0.0
        %422 = vmatpush1.xpose.msra.mxu0 %v334
        %423 = vmatprep.subr.mxu0 0.0
        %424 = vmatpush2.xpose.msra.mxu0 0.0
        %425 = vmatprep.subr.mxu0 0.0
        %426 = vmatpush2.xpose.msra.mxu0 0.0
        %427 = vmatprep.subr.mxu0 0.0
        %428 = vmatpush2.xpose.msra.mxu0 0.0
        %429 = vmatprep.subr.mxu0 0.0
        %430 = vmatpush2.xpose.msra.mxu0 0.0
        %431 = vmatprep.subr.mxu0 0.0
        %432 = vmatpush2.xpose.msra.mxu0 0.0
        %433 = vmatprep.subr.mxu0 0.0
        %434 = vmatpush2.xpose.msra.mxu0 0.0
        %435 = vmatprep.subr.mxu0 0.0
        %436 = vmatpush2.xpose.msra.mxu0 0.0
        %437 = vmatprep.subr.mxu0 0.0
        %438 = vmatpush2.xpose.msra.mxu0 0.0
        %439 = vmatprep.subr.mxu0 0.0
        %440 = vmatpush2.xpose.msra.mxu0 0.0
        %441 = vmatprep.subr.mxu0 0.0
        %442 = vmatpush2.xpose.msra.mxu0 0.0
        %443 = vmatprep.subr.mxu0 0.0
        %444 = vmatpush2.xpose.msra.mxu0 0.0
        %445 = vmatprep.subr.mxu0 0.0
        %446 = vmatpush2.xpose.msra.mxu0 0.0
        %447 = vmatprep.subr.mxu0 0.0
        %448 = vmatpush2.xpose.msra.mxu0 0.0
        %449 = vmatprep.subr.mxu0 0.0
        %450 = vmatpush2.xpose.msra.mxu0 0.0
        %451 = vmatprep.subr.mxu0 0.0
        %452 = vmatpush2.xpose.msra.mxu0 0.0
        %453 = vmatprep.subr.mxu0 0.0
        %454 = vmatpush2.xpose.msra.mxu0 0.0
        %455 = vmatprep.mubr.f32.mxu0 0.0
        %456 = vmatmul.mubr.f32.gmra.mxu0 %v387
        %v457 = vpop.f32.mrf.mxu0
        %v458 = vadd.f32 0.0, %v457
        %v459 = vpop.f32.mrf.mxu0
        %460 = vmatprep.mubr.f32.mxu0 0.0
        %461 = vmatmul.mubr.f32.gmra.mxu0 %v388
        %v462 = vpop.f32.mrf.mxu0
        %v463 = vadd.f32 0.0, %v462
        %v464 = vpop.f32.mrf.mxu0
        %465 = vmatprep.mubr.f32.mxu0 0.0
        %466 = vmatmul.mubr.f32.gmra.mxu0 %v389
        %v467 = vpop.f32.mrf.mxu0
        %v468 = vadd.f32 0.0, %v467
        %v469 = vpop.f32.mrf.mxu0
        %470 = vmatprep.mubr.f32.mxu0 0.0
        %471 = vmatmul.mubr.f32.gmra.mxu0 %v390
        %v472 = vpop.f32.mrf.mxu0
        %v473 = vadd.f32 0.0, %v472
        %v474 = vpop.f32.mrf.mxu0
        %475 = vdwg.mxu0
        %v476 = vmul.f32 %v458, 0.0078125
        %v477 = vmul.f32 %v463, 0.0078125
        %v478 = vmul.f32 %v468, 0.0078125
        %v479 = vmul.f32 %v473, 0.0078125
        %vm480 = vcmask 261120
        %v481 = vsel %vm480, %v312, 0
        %v483 = vsel %vm480, %v314, 0
        %v485 = vsel %vm480, %v316, 0
        %v487 = vsel %vm480, %v318, 0
        %489 = vmatprep.subr.mxu0 0.0
        %490 = vmatpush1.msra.mxu0 0.0
        %491 = vmatprep.subr.mxu0 0.0
        %492 = vmatpush1.msra.mxu0 0.0
        %493 = vmatprep.subr.mxu0 0.0
        %494 = vmatpush1.msra.mxu0 0.0
        %495 = vmatprep.subr.mxu0 0.0
        %496 = vmatpush1.msra.mxu0 0.0
        %497 = vmatprep.subr.mxu0 0.0
        %498 = vmatpush1.msra.mxu0 0.0
        %499 = vmatprep.subr.mxu0 0.0
        %500 = vmatpush1.msra.mxu0 0.0
        %501 = vmatprep.subr.mxu0 0.0
        %502 = vmatpush1.msra.mxu0 0.0
        %503 = vmatprep.subr.mxu0 0.0
        %504 = vmatpush1.msra.mxu0 0.0
        %505 = vmatprep.subr.mxu0 0.0
        %506 = vmatpush1.msra.mxu0 0.0
        %507 = vmatprep.subr.mxu0 0.0
        %508 = vmatpush1.msra.mxu0 0.0
        %509 = vmatprep.subr.mxu0 0.0
        %510 = vmatpush1.msra.mxu0 0.0
        %511 = vmatprep.subr.mxu0 0.0
        %512 = vmatpush1.msra.mxu0 0.0
        %513 = vmatprep.subr.mxu0 0.0
        %514 = vmatpush1.msra.mxu0 %v479
        %515 = vmatprep.subr.mxu0 0.0
        %516 = vmatpush1.msra.mxu0 %v478
        %517 = vmatprep.subr.mxu0 0.0
        %518 = vmatpush1.msra.mxu0 %v477
        %519 = vmatprep.subr.mxu0 0.0
        %520 = vmatpush1.msra.mxu0 %v476
        %521 = vmatprep.subr.mxu0 0.0
        %522 = vmatpush2.msra.mxu0 0.0
        %523 = vmatprep.subr.mxu0 0.0
        %524 = vmatpush2.msra.mxu0 0.0
        %525 = vmatprep.subr.mxu0 0.0
        %526 = vmatpush2.msra.mxu0 0.0
        %527 = vmatprep.subr.mxu0 0.0
        %528 = vmatpush2.msra.mxu0 0.0
        %529 = vmatprep.subr.mxu0 0.0
        %530 = vmatpush2.msra.mxu0 0.0
        %531 = vmatprep.subr.mxu0 0.0
        %532 = vmatpush2.msra.mxu0 0.0
        %533 = vmatprep.subr.mxu0 0.0
        %534 = vmatpush2.msra.mxu0 0.0
        %535 = vmatprep.subr.mxu0 0.0
        %536 = vmatpush2.msra.mxu0 0.0
        %537 = vmatprep.subr.mxu0 0.0
        %538 = vmatpush2.msra.mxu0 0.0
        %539 = vmatprep.subr.mxu0 0.0
        %540 = vmatpush2.msra.mxu0 0.0
        %541 = vmatprep.subr.mxu0 0.0
        %542 = vmatpush2.msra.mxu0 0.0
        %543 = vmatprep.subr.mxu0 0.0
        %544 = vmatpush2.msra.mxu0 0.0
        %545 = vmatprep.subr.mxu0 0.0
        %546 = vmatpush2.msra.mxu0 0.0
        %547 = vmatprep.subr.mxu0 0.0
        %548 = vmatpush2.msra.mxu0 0.0
        %549 = vmatprep.subr.mxu0 0.0
        %550 = vmatpush2.msra.mxu0 0.0
        %551 = vmatprep.subr.mxu0 0.0
        %552 = vmatpush2.msra.mxu0 0.0
        %553 = vmatprep.mubr.f32.mxu0 0.0
        %554 = vmatmul.mubr.f32.gmra.mxu0 %v481
        %v555 = vpop.f32.mrf.mxu0
        %v556 = vadd.f32 0.0, %v555
        %v557 = vpop.f32.mrf.mxu0
        %558 = vmatprep.mubr.f32.mxu0 0.0
        %559 = vmatmul.mubr.f32.gmra.mxu0 %v483
        %v560 = vpop.f32.mrf.mxu0
        %v561 = vadd.f32 0.0, %v560
        %v562 = vpop.f32.mrf.mxu0
        %563 = vmatprep.mubr.f32.mxu0 0.0
        %564 = vmatmul.mubr.f32.gmra.mxu0 %v485
        %v565 = vpop.f32.mrf.mxu0
        %v566 = vadd.f32 0.0, %v565
        %v567 = vpop.f32.mrf.mxu0
        %568 = vmatprep.mubr.f32.mxu0 0.0
        %569 = vmatmul.mubr.f32.gmra.mxu0 %v487
        %v570 = vpop.f32.mrf.mxu0
        %v571 = vadd.f32 0.0, %v570
        %v572 = vpop.f32.mrf.mxu0
        %573 = vdwg.mxu0
        %574 = vadd.xlane.f32.xlu0 %v387
        %v575 = vpop.xlane.xlu0 %574
        %576 = vadd.xlane.f32.xlu0 %v388
        %v577 = vpop.xlane.xlu0 %576
        %578 = vadd.xlane.f32.xlu0 %v389
        %v579 = vpop.xlane.xlu0 %578
        %580 = vadd.xlane.f32.xlu0 %v390
        %v581 = vpop.xlane.xlu0 %580
        %v582 = vmul.f32 %v575, %v332
        %v583 = vmul.f32 %v577, %v332
        %v584 = vmul.f32 %v579, %v332
        %v585 = vmul.f32 %v581, %v332
        %586 = vrot.lane.b32.xlu0 %v312, 96
        %v587 = vpop.permute.xlu0 %586
        %588 = vrot.lane.b32.xlu0 %v314, 96
        %v589 = vpop.permute.xlu0 %588
        %590 = vrot.lane.b32.xlu0 %v316, 96
        %v591 = vpop.permute.xlu0 %590
        %592 = vrot.lane.b32.xlu0 %v318, 96
        %v593 = vpop.permute.xlu0 %592
        %v594 = vsel %vm480, %v587, 0
        %v596 = vsel %vm480, %v589, 0
        %v598 = vsel %vm480, %v591, 0
        %v600 = vsel %vm480, %v593, 0
        %602 = vmatprep.subr.mxu0 0.0
        %603 = vmatpush1.msra.mxu0 0.0
        %604 = vmatprep.subr.mxu0 0.0
        %605 = vmatpush1.msra.mxu0 0.0
        %606 = vmatprep.subr.mxu0 0.0
        %607 = vmatpush1.msra.mxu0 0.0
        %608 = vmatprep.subr.mxu0 0.0
        %609 = vmatpush1.msra.mxu0 0.0
        %610 = vmatprep.subr.mxu0 0.0
        %611 = vmatpush1.msra.mxu0 0.0
        %612 = vmatprep.subr.mxu0 0.0
        %613 = vmatpush1.msra.mxu0 0.0
        %614 = vmatprep.subr.mxu0 0.0
        %615 = vmatpush1.msra.mxu0 0.0
        %616 = vmatprep.subr.mxu0 0.0
        %617 = vmatpush1.msra.mxu0 0.0
        %618 = vmatprep.subr.mxu0 0.0
        %619 = vmatpush1.msra.mxu0 0.0
        %620 = vmatprep.subr.mxu0 0.0
        %621 = vmatpush1.msra.mxu0 0.0
        %622 = vmatprep.subr.mxu0 0.0
        %623 = vmatpush1.msra.mxu0 0.0
        %624 = vmatprep.subr.mxu0 0.0
        %625 = vmatpush1.msra.mxu0 0.0
        %626 = vmatprep.subr.mxu0 0.0
        %627 = vmatpush1.msra.mxu0 %v585
        %628 = vmatprep.subr.mxu0 0.0
        %629 = vmatpush1.msra.mxu0 %v584
        %630 = vmatprep.subr.mxu0 0.0
        %631 = vmatpush1.msra.mxu0 %v583
        %632 = vmatprep.subr.mxu0 0.0
        %633 = vmatpush1.msra.mxu0 %v582
        %634 = vmatprep.subr.mxu0 0.0
        %635 = vmatpush2.msra.mxu0 0.0
        %636 = vmatprep.subr.mxu0 0.0
        %637 = vmatpush2.msra.mxu0 0.0
        %638 = vmatprep.subr.mxu0 0.0
        %639 = vmatpush2.msra.mxu0 0.0
        %640 = vmatprep.subr.mxu0 0.0
        %641 = vmatpush2.msra.mxu0 0.0
        %642 = vmatprep.subr.mxu0 0.0
        %643 = vmatpush2.msra.mxu0 0.0
        %644 = vmatprep.subr.mxu0 0.0
        %645 = vmatpush2.msra.mxu0 0.0
        %646 = vmatprep.subr.mxu0 0.0
        %647 = vmatpush2.msra.mxu0 0.0
        %648 = vmatprep.subr.mxu0 0.0
        %649 = vmatpush2.msra.mxu0 0.0
        %650 = vmatprep.subr.mxu0 0.0
        %651 = vmatpush2.msra.mxu0 0.0
        %652 = vmatprep.subr.mxu0 0.0
        %653 = vmatpush2.msra.mxu0 0.0
        %654 = vmatprep.subr.mxu0 0.0
        %655 = vmatpush2.msra.mxu0 0.0
        %656 = vmatprep.subr.mxu0 0.0
        %657 = vmatpush2.msra.mxu0 0.0
        %658 = vmatprep.subr.mxu0 0.0
        %659 = vmatpush2.msra.mxu0 0.0
        %660 = vmatprep.subr.mxu0 0.0
        %661 = vmatpush2.msra.mxu0 0.0
        %662 = vmatprep.subr.mxu0 0.0
        %663 = vmatpush2.msra.mxu0 0.0
        %664 = vmatprep.subr.mxu0 0.0
        %665 = vmatpush2.msra.mxu0 0.0
        %666 = vmatprep.mubr.f32.mxu0 0.0
        %667 = vmatmul.mubr.f32.gmra.mxu0 %v594
        %v668 = vpop.f32.mrf.mxu0
        %v669 = vadd.f32 0.0, %v668
        %v670 = vpop.f32.mrf.mxu0
        %671 = vmatprep.mubr.f32.mxu0 0.0
        %672 = vmatmul.mubr.f32.gmra.mxu0 %v596
        %v673 = vpop.f32.mrf.mxu0
        %v674 = vadd.f32 0.0, %v673
        %v675 = vpop.f32.mrf.mxu0
        %676 = vmatprep.mubr.f32.mxu0 0.0
        %677 = vmatmul.mubr.f32.gmra.mxu0 %v598
        %v678 = vpop.f32.mrf.mxu0
        %v679 = vadd.f32 0.0, %v678
        %v680 = vpop.f32.mrf.mxu0
        %681 = vmatprep.mubr.f32.mxu0 0.0
        %682 = vmatmul.mubr.f32.gmra.mxu0 %v600
        %v683 = vpop.f32.mrf.mxu0
        %v684 = vadd.f32 0.0, %v683
        %v685 = vpop.f32.mrf.mxu0
        %686 = vdwg.mxu0
        %v687 = vadd.f32 %v342, 1e-08
        %v688 = vrsqrt.pop %v687
        %v689 = vmul.f32 %v687, %v688
        %vm690 = vcmp.eq.f32.partialorder %v687, inf
        %v691 = vsel %vm690, %v687, %v689
        %vm692 = vcmp.eq.f32.partialorder %v687, 0.0
        %v693 = vand.u32 %v687, 2147483648
        %v694 = vsel %vm692, %v693, %v691
        %695 = vadd.xlane.f32.xlu0 %v694
        %v696 = vpop.xlane.xlu0 %695
        %v697 = vmul.f32 %v696, %v332
        %v698 = vadd.f32 %v697, 0.0
        %v699 = vmax.f32 %v698, 0.0
        %vm700 = vcmp.ne.f32.partialorder %v698, %v698
        %v701 = vadd.f32 %v698, 0.0
        %v702 = vand.u32 2147483647, %v698
        %v703 = vsub.f32 0.0, %v702
        %v704 = vmul.f32 %v703, 1.442695
        %v705 = vpow.pop %v704
        %v706 = vadd.f32 %v705, 1.0
        %v707 = vlog2.pop %v706
        %v708 = vmul.f32 %v707, 0.6931472
        %v709 = vmul.f32 -0.5, %v705
        %v710 = vadd.f32 %v709, 1.0
        %v711 = vmul.f32 %v710, %v705
        %v712 = vand.u32 2147483647, %v705
        %vm713 = vcmp.lt.f32.partialorder %v712, 0.0004427343
        %v714 = vsel %vm713, %v711, %v708
        %v715 = vadd.f32 %v699, %v714
        %v716 = vsel %vm700, %v701, %v715
        %v717 = vrcp.pop %v716
        %v718 = vmul.f32 1.0, %v717
        %727 = vrot.lane.b32.xlu0 %v311, 64
        %v728 = vpop.permute.xlu0 %727
        %729 = vrot.lane.b32.xlu0 %v313, 64
        %v730 = vpop.permute.xlu0 %729
        %731 = vrot.lane.b32.xlu0 %v315, 64
        %v732 = vpop.permute.xlu0 %731
        %733 = vrot.lane.b32.xlu0 %v317, 64
        %v734 = vpop.permute.xlu0 %733
        %735 = vrot.lane.b32.xlu0 %v319, 64
        %v736 = vpop.permute.xlu0 %735
        %737 = vrot.lane.b32.xlu0 %v321, 64
        %v738 = vpop.permute.xlu0 %737
        %739 = vrot.lane.b32.xlu0 %v323, 64
        %v740 = vpop.permute.xlu0 %739
        %741 = vrot.lane.b32.xlu0 %v325, 64
        %v742 = vpop.permute.xlu0 %741
        %v743 = vsel %vm480, %v728, 0
        %v745 = vsel %vm480, %v730, 0
        %v747 = vsel %vm480, %v732, 0
        %v749 = vsel %vm480, %v734, 0
        %v751 = vsel %vm480, %v736, 0
        %v753 = vsel %vm480, %v738, 0
        %v755 = vsel %vm480, %v740, 0
        %v757 = vsel %vm480, %v742, 0
        %759 = vmatprep.subr.mxu0 0.0
        %760 = vmatpush1.msra.mxu0 0.0
        %761 = vmatprep.subr.mxu0 0.0
        %762 = vmatpush1.msra.mxu0 0.0
        %763 = vmatprep.subr.mxu0 0.0
        %764 = vmatpush1.msra.mxu0 0.0
        %765 = vmatprep.subr.mxu0 0.0
        %766 = vmatpush1.msra.mxu0 0.0
        %767 = vmatprep.subr.mxu0 0.0
        %768 = vmatpush1.msra.mxu0 0.0
        %769 = vmatprep.subr.mxu0 0.0
        %770 = vmatpush1.msra.mxu0 0.0
        %771 = vmatprep.subr.mxu0 0.0
        %772 = vmatpush1.msra.mxu0 0.0
        %773 = vmatprep.subr.mxu0 0.0
        %774 = vmatpush1.msra.mxu0 0.0
        %775 = vmatprep.subr.mxu0 0.0
        %776 = vmatpush1.msra.mxu0 0.0
        %777 = vmatprep.subr.mxu0 0.0
        %778 = vmatpush1.msra.mxu0 0.0
        %779 = vmatprep.subr.mxu0 0.0
        %780 = vmatpush1.msra.mxu0 0.0
        %781 = vmatprep.subr.mxu0 0.0
        %782 = vmatpush1.msra.mxu0 0.0
        %783 = vmatprep.subr.mxu0 0.0
        %784 = vmatpush1.msra.mxu0 %v571
        %785 = vmatprep.subr.mxu0 0.0
        %786 = vmatpush1.msra.mxu0 %v566
        %787 = vmatprep.subr.mxu0 0.0
        %788 = vmatpush1.msra.mxu0 %v561
        %789 = vmatprep.subr.mxu0 0.0
        %790 = vmatpush1.msra.mxu0 %v556
        %791 = vmatprep.subr.mxu0 0.0
        %792 = vmatpush2.msra.mxu0 0.0
        %793 = vmatprep.subr.mxu0 0.0
        %794 = vmatpush2.msra.mxu0 0.0
        %795 = vmatprep.subr.mxu0 0.0
        %796 = vmatpush2.msra.mxu0 0.0
        %797 = vmatprep.subr.mxu0 0.0
        %798 = vmatpush2.msra.mxu0 0.0
        %799 = vmatprep.subr.mxu0 0.0
        %800 = vmatpush2.msra.mxu0 0.0
        %801 = vmatprep.subr.mxu0 0.0
        %802 = vmatpush2.msra.mxu0 0.0
        %803 = vmatprep.subr.mxu0 0.0
        %804 = vmatpush2.msra.mxu0 0.0
        %805 = vmatprep.subr.mxu0 0.0
        %806 = vmatpush2.msra.mxu0 0.0
        %807 = vmatprep.subr.mxu0 0.0
        %808 = vmatpush2.msra.mxu0 0.0
        %809 = vmatprep.subr.mxu0 0.0
        %810 = vmatpush2.msra.mxu0 0.0
        %811 = vmatprep.subr.mxu0 0.0
        %812 = vmatpush2.msra.mxu0 0.0
        %813 = vmatprep.subr.mxu0 0.0
        %814 = vmatpush2.msra.mxu0 0.0
        %815 = vmatprep.subr.mxu0 0.0
        %816 = vmatpush2.msra.mxu0 0.0
        %817 = vmatprep.subr.mxu0 0.0
        %818 = vmatpush2.msra.mxu0 0.0
        %819 = vmatprep.subr.mxu0 0.0
        %820 = vmatpush2.msra.mxu0 0.0
        %821 = vmatprep.subr.mxu0 0.0
        %822 = vmatpush2.msra.mxu0 0.0
        %823 = vmatprep.mubr.f32.mxu0 0.0
        %824 = vmatmul.mubr.f32.gmra.mxu0 %v743
        %v825 = vpop.f32.mrf.mxu0
        %v826 = vadd.f32 0.0, %v825
        %v827 = vpop.f32.mrf.mxu0
        %828 = vmatprep.mubr.f32.mxu0 0.0
        %829 = vmatmul.mubr.f32.gmra.mxu0 %v745
        %v830 = vpop.f32.mrf.mxu0
        %v831 = vadd.f32 0.0, %v830
        %v832 = vpop.f32.mrf.mxu0
        %833 = vmatprep.mubr.f32.mxu0 0.0
        %834 = vmatmul.mubr.f32.gmra.mxu0 %v747
        %v835 = vpop.f32.mrf.mxu0
        %v836 = vadd.f32 0.0, %v835
        %v837 = vpop.f32.mrf.mxu0
        %838 = vmatprep.mubr.f32.mxu0 0.0
        %839 = vmatmul.mubr.f32.gmra.mxu0 %v749
        %v840 = vpop.f32.mrf.mxu0
        %v841 = vadd.f32 0.0, %v840
        %v842 = vpop.f32.mrf.mxu0
        %843 = vmatprep.mubr.f32.mxu0 0.0
        %844 = vmatmul.mubr.f32.gmra.mxu0 %v751
        %v845 = vpop.f32.mrf.mxu0
        %v846 = vadd.f32 0.0, %v845
        %v847 = vpop.f32.mrf.mxu0
        %848 = vmatprep.mubr.f32.mxu0 0.0
        %849 = vmatmul.mubr.f32.gmra.mxu0 %v753
        %v850 = vpop.f32.mrf.mxu0
        %v851 = vadd.f32 0.0, %v850
        %v852 = vpop.f32.mrf.mxu0
        %853 = vmatprep.mubr.f32.mxu0 0.0
        %854 = vmatmul.mubr.f32.gmra.mxu0 %v755
        %v855 = vpop.f32.mrf.mxu0
        %v856 = vadd.f32 0.0, %v855
        %v857 = vpop.f32.mrf.mxu0
        %858 = vmatprep.mubr.f32.mxu0 0.0
        %859 = vmatmul.mubr.f32.gmra.mxu0 %v757
        %v860 = vpop.f32.mrf.mxu0
        %v861 = vadd.f32 0.0, %v860
        %v862 = vpop.f32.mrf.mxu0
        %863 = vdwg.mxu0
        %868 = vrot.lane.b32.xlu0 %v312, 65
        %v869 = vpop.permute.xlu0 %868
        %870 = vrot.lane.b32.xlu0 %v314, 65
        %v871 = vpop.permute.xlu0 %870
        %872 = vrot.lane.b32.xlu0 %v316, 65
        %v873 = vpop.permute.xlu0 %872
        %874 = vrot.lane.b32.xlu0 %v318, 65
        %v875 = vpop.permute.xlu0 %874
        %876 = vrot.lane.b32.xlu0 %v320, 65
        %v877 = vpop.permute.xlu0 %876
        %878 = vrot.lane.b32.xlu0 %v322, 65
        %v879 = vpop.permute.xlu0 %878
        %880 = vrot.lane.b32.xlu0 %v324, 65
        %v881 = vpop.permute.xlu0 %880
        %882 = vrot.lane.b32.xlu0 %v326, 65
        %v883 = vpop.permute.xlu0 %882
        %vm892 = vcmask 23552
        %v893 = vsel %vm892, %v826, %v869
        %v894 = vsel %vm892, %v831, %v871
        %v895 = vsel %vm892, %v836, %v873
        %v896 = vsel %vm892, %v841, %v875
        %v897 = vsel %vm892, %v846, %v877
        %v898 = vsel %vm892, %v851, %v879
        %v899 = vsel %vm892, %v856, %v881
        %v900 = vsel %vm892, %v861, %v883
        %901 = vrot.lane.b32.xlu0 %v311, 32
        %v902 = vpop.permute.xlu0 %901
        %903 = vrot.lane.b32.xlu0 %v313, 32
        %v904 = vpop.permute.xlu0 %903
        %905 = vrot.lane.b32.xlu0 %v315, 32
        %v906 = vpop.permute.xlu0 %905
        %907 = vrot.lane.b32.xlu0 %v317, 32
        %v908 = vpop.permute.xlu0 %907
        %909 = vrot.lane.b32.xlu0 %v319, 32
        %v910 = vpop.permute.xlu0 %909
        %911 = vrot.lane.b32.xlu0 %v321, 32
        %v912 = vpop.permute.xlu0 %911
        %913 = vrot.lane.b32.xlu0 %v323, 32
        %v914 = vpop.permute.xlu0 %913
        %915 = vrot.lane.b32.xlu0 %v325, 32
        %v916 = vpop.permute.xlu0 %915
        %917 = vrot.lane.b32.xlu0 %v312, 61
        %v918 = vpop.permute.xlu0 %917
        %919 = vrot.lane.b32.xlu0 %v314, 61
        %v920 = vpop.permute.xlu0 %919
        %921 = vrot.lane.b32.xlu0 %v316, 61
        %v922 = vpop.permute.xlu0 %921
        %923 = vrot.lane.b32.xlu0 %v318, 61
        %v924 = vpop.permute.xlu0 %923
        %925 = vrot.lane.b32.xlu0 %v320, 61
        %v926 = vpop.permute.xlu0 %925
        %927 = vrot.lane.b32.xlu0 %v322, 61
        %v928 = vpop.permute.xlu0 %927
        %929 = vrot.lane.b32.xlu0 %v324, 61
        %v930 = vpop.permute.xlu0 %929
        %931 = vrot.lane.b32.xlu0 %v326, 61
        %v932 = vpop.permute.xlu0 %931
        %v941 = vsel %vm480, %v902, 0
        %v943 = vsel %vm480, %v904, 0
        %v945 = vsel %vm480, %v906, 0
        %v947 = vsel %vm480, %v908, 0
        %v949 = vsel %vm480, %v910, 0
        %v951 = vsel %vm480, %v912, 0
        %v953 = vsel %vm480, %v914, 0
        %v955 = vsel %vm480, %v916, 0
        %957 = vmatprep.subr.mxu0 0.0
        %958 = vmatpush1.msra.mxu0 0.0
        %959 = vmatprep.subr.mxu0 0.0
        %960 = vmatpush1.msra.mxu0 0.0
        %961 = vmatprep.subr.mxu0 0.0
        %962 = vmatpush1.msra.mxu0 0.0
        %963 = vmatprep.subr.mxu0 0.0
        %964 = vmatpush1.msra.mxu0 0.0
        %965 = vmatprep.subr.mxu0 0.0
        %966 = vmatpush1.msra.mxu0 0.0
        %967 = vmatprep.subr.mxu0 0.0
        %968 = vmatpush1.msra.mxu0 0.0
        %969 = vmatprep.subr.mxu0 0.0
        %970 = vmatpush1.msra.mxu0 0.0
        %971 = vmatprep.subr.mxu0 0.0
        %972 = vmatpush1.msra.mxu0 0.0
        %973 = vmatprep.subr.mxu0 0.0
        %974 = vmatpush1.msra.mxu0 0.0
        %975 = vmatprep.subr.mxu0 0.0
        %976 = vmatpush1.msra.mxu0 0.0
        %977 = vmatprep.subr.mxu0 0.0
        %978 = vmatpush1.msra.mxu0 0.0
        %979 = vmatprep.subr.mxu0 0.0
        %980 = vmatpush1.msra.mxu0 0.0
        %981 = vmatprep.subr.mxu0 0.0
        %982 = vmatpush1.msra.mxu0 %v684
        %983 = vmatprep.subr.mxu0 0.0
        %984 = vmatpush1.msra.mxu0 %v679
        %985 = vmatprep.subr.mxu0 0.0
        %986 = vmatpush1.msra.mxu0 %v674
        %987 = vmatprep.subr.mxu0 0.0
        %988 = vmatpush1.msra.mxu0 %v669
        %989 = vmatprep.subr.mxu0 0.0
        %990 = vmatpush2.msra.mxu0 0.0
        %991 = vmatprep.subr.mxu0 0.0
        %992 = vmatpush2.msra.mxu0 0.0
        %993 = vmatprep.subr.mxu0 0.0
        %994 = vmatpush2.msra.mxu0 0.0
        %995 = vmatprep.subr.mxu0 0.0
        %996 = vmatpush2.msra.mxu0 0.0
        %997 = vmatprep.subr.mxu0 0.0
        %998 = vmatpush2.msra.mxu0 0.0
        %999 = vmatprep.subr.mxu0 0.0
        %1000 = vmatpush2.msra.mxu0 0.0
        %1001 = vmatprep.subr.mxu0 0.0
        %1002 = vmatpush2.msra.mxu0 0.0
        %1003 = vmatprep.subr.mxu0 0.0
        %1004 = vmatpush2.msra.mxu0 0.0
        %1005 = vmatprep.subr.mxu0 0.0
        %1006 = vmatpush2.msra.mxu0 0.0
        %1007 = vmatprep.subr.mxu0 0.0
        %1008 = vmatpush2.msra.mxu0 0.0
        %1009 = vmatprep.subr.mxu0 0.0
        %1010 = vmatpush2.msra.mxu0 0.0
        %1011 = vmatprep.subr.mxu0 0.0
        %1012 = vmatpush2.msra.mxu0 0.0
        %1013 = vmatprep.subr.mxu0 0.0
        %1014 = vmatpush2.msra.mxu0 0.0
        %1015 = vmatprep.subr.mxu0 0.0
        %1016 = vmatpush2.msra.mxu0 0.0
        %1017 = vmatprep.subr.mxu0 0.0
        %1018 = vmatpush2.msra.mxu0 0.0
        %1019 = vmatprep.subr.mxu0 0.0
        %1020 = vmatpush2.msra.mxu0 0.0
        %1021 = vmatprep.mubr.f32.mxu0 0.0
        %1022 = vmatmul.mubr.f32.gmra.mxu0 %v941
        %v1023 = vpop.f32.mrf.mxu0
        %v1024 = vadd.f32 %v918, %v1023
        %v1025 = vpop.f32.mrf.mxu0
        %1026 = vmatprep.mubr.f32.mxu0 0.0
        %1027 = vmatmul.mubr.f32.gmra.mxu0 %v943
        %v1028 = vpop.f32.mrf.mxu0
        %v1029 = vadd.f32 %v920, %v1028
        %v1030 = vpop.f32.mrf.mxu0
        %1031 = vmatprep.mubr.f32.mxu0 0.0
        %1032 = vmatmul.mubr.f32.gmra.mxu0 %v945
        %v1033 = vpop.f32.mrf.mxu0
        %v1034 = vadd.f32 %v922, %v1033
        %v1035 = vpop.f32.mrf.mxu0
        %1036 = vmatprep.mubr.f32.mxu0 0.0
        %1037 = vmatmul.mubr.f32.gmra.mxu0 %v947
        %v1038 = vpop.f32.mrf.mxu0
        %v1039 = vadd.f32 %v924, %v1038
        %v1040 = vpop.f32.mrf.mxu0
        %1041 = vmatprep.mubr.f32.mxu0 0.0
        %1042 = vmatmul.mubr.f32.gmra.mxu0 %v949
        %v1043 = vpop.f32.mrf.mxu0
        %v1044 = vadd.f32 %v926, %v1043
        %v1045 = vpop.f32.mrf.mxu0
        %1046 = vmatprep.mubr.f32.mxu0 0.0
        %1047 = vmatmul.mubr.f32.gmra.mxu0 %v951
        %v1048 = vpop.f32.mrf.mxu0
        %v1049 = vadd.f32 %v928, %v1048
        %v1050 = vpop.f32.mrf.mxu0
        %1051 = vmatprep.mubr.f32.mxu0 0.0
        %1052 = vmatmul.mubr.f32.gmra.mxu0 %v953
        %v1053 = vpop.f32.mrf.mxu0
        %v1054 = vadd.f32 %v930, %v1053
        %v1055 = vpop.f32.mrf.mxu0
        %1056 = vmatprep.mubr.f32.mxu0 0.0
        %1057 = vmatmul.mubr.f32.gmra.mxu0 %v955
        %v1058 = vpop.f32.mrf.mxu0
        %v1059 = vadd.f32 %v932, %v1058
        %v1060 = vpop.f32.mrf.mxu0
        %1061 = vdwg.mxu0
        %v1062 = vld [vmem:[%s307] sm:$0x77]
        %v1063 = vsub.f32 %v1062, %v333
        %v1064 = vmul.f32 %v1063, %v718
        %v1065 = vmul.f32 %v1064, %v1064
        %v1066 = vsel %vm328, %v1065, 0.0
        %v1067 = vrot.slane %v1066, 4
        %v1068 = vadd.f32 %v1066, %v1067
        %v1069 = vrot.slane %v1068, 2
        %v1070 = vadd.f32 %v1068, %v1069
        %v1071 = vrot.slane %v1070, 1
        %v1072 = vadd.f32 %v1070, %v1071
        %v1073 = vrsqrt.pop %v1072
        %v1074 = vmul.f32 %v1072, %v1073
        %vm1075 = vcmp.eq.f32.partialorder %v1072, inf
        %v1076 = vsel %vm1075, %v1072, %v1074
        %vm1077 = vcmp.eq.f32.partialorder %v1072, 0.0
        %v1078 = vand.u32 %v1072, 2147483648
        %v1079 = vsel %vm1077, %v1078, %v1076
        %v1080 = vsel %vm328, %v1064, %v1079
        %1082 = vset.pattern.permute.xlu0 0
        %1083 = vperm.xlu0 %1082, %v1024
        %v1084 = vpop.permute.xlu0 %1083
        %1087 = vset.pattern.permute.xlu0 0
        %1088 = vperm.xlu0 %1087, %v1029
        %v1089 = vpop.permute.xlu0 %1088
        %1092 = vset.pattern.permute.xlu0 0
        %1093 = vperm.xlu0 %1092, %v1034
        %v1094 = vpop.permute.xlu0 %1093
        %1097 = vset.pattern.permute.xlu0 0
        %1098 = vperm.xlu0 %1097, %v1039
        %v1099 = vpop.permute.xlu0 %1098
        %1102 = vset.pattern.permute.xlu0 0
        %1103 = vperm.xlu0 %1102, %v1044
        %v1104 = vpop.permute.xlu0 %1103
        %1107 = vset.pattern.permute.xlu0 0
        %1108 = vperm.xlu0 %1107, %v1049
        %v1109 = vpop.permute.xlu0 %1108
        %1112 = vset.pattern.permute.xlu0 0
        %1113 = vperm.xlu0 %1112, %v1054
        %v1114 = vpop.permute.xlu0 %1113
        %1117 = vset.pattern.permute.xlu0 0
        %1118 = vperm.xlu0 %1117, %v1059
        %v1119 = vpop.permute.xlu0 %1118
        %vm1121 = vcmask 31744
        %v1123 = vsel %vm1121, %v893, 0
        %v1126 = vsel %vm1121, %v894, 0
        %v1129 = vsel %vm1121, %v895, 0
        %v1132 = vsel %vm1121, %v896, 0
        %v1135 = vsel %vm1121, %v897, 0
        %v1138 = vsel %vm1121, %v898, 0
        %v1141 = vsel %vm1121, %v899, 0
        %v1144 = vsel %vm1121, %v900, 0
        %vm1146 = vcmask 1043456
        %v1148 = vsel %vm1146, %v1080, 0
        %1150 = vmatprep.subr.mxu0 0.0
        %1151 = vmatpush1.msra.mxu0 0.0
        %1152 = vmatprep.subr.mxu0 0.0
        %1153 = vmatpush1.msra.mxu0 0.0
        %1154 = vmatprep.subr.mxu0 0.0
        %1155 = vmatpush1.msra.mxu0 0.0
        %1156 = vmatprep.subr.mxu0 0.0
        %1157 = vmatpush1.msra.mxu0 0.0
        %1158 = vmatprep.subr.mxu0 0.0
        %1159 = vmatpush1.msra.mxu0 0.0
        %1160 = vmatprep.subr.mxu0 0.0
        %1161 = vmatpush1.msra.mxu0 0.0
        %1162 = vmatprep.subr.mxu0 0.0
        %1163 = vmatpush1.msra.mxu0 0.0
        %1164 = vmatprep.subr.mxu0 0.0
        %1165 = vmatpush1.msra.mxu0 0.0
        %1166 = vmatprep.subr.mxu0 0.0
        %1167 = vmatpush1.msra.mxu0 0.0
        %1168 = vmatprep.subr.mxu0 0.0
        %1169 = vmatpush1.msra.mxu0 0.0
        %1170 = vmatprep.subr.mxu0 0.0
        %1171 = vmatpush1.msra.mxu0 0.0
        %1172 = vmatprep.subr.mxu0 0.0
        %1173 = vmatpush1.msra.mxu0 0.0
        %1174 = vmatprep.subr.mxu0 0.0
        %1175 = vmatpush1.msra.mxu0 0.0
        %1176 = vmatprep.subr.mxu0 0.0
        %1177 = vmatpush1.msra.mxu0 0.0
        %1178 = vmatprep.subr.mxu0 0.0
        %1179 = vmatpush1.msra.mxu0 0.0
        %1180 = vmatprep.subr.mxu0 0.0
        %1181 = vmatpush1.msra.mxu0 %v1148
        %1182 = vmatprep.subr.mxu0 0.0
        %1183 = vmatpush2.msra.mxu0 0.0
        %1184 = vmatprep.subr.mxu0 0.0
        %1185 = vmatpush2.msra.mxu0 0.0
        %1186 = vmatprep.subr.mxu0 0.0
        %1187 = vmatpush2.msra.mxu0 0.0
        %1188 = vmatprep.subr.mxu0 0.0
        %1189 = vmatpush2.msra.mxu0 0.0
        %1190 = vmatprep.subr.mxu0 0.0
        %1191 = vmatpush2.msra.mxu0 0.0
        %1192 = vmatprep.subr.mxu0 0.0
        %1193 = vmatpush2.msra.mxu0 0.0
        %1194 = vmatprep.subr.mxu0 0.0
        %1195 = vmatpush2.msra.mxu0 0.0
        %1196 = vmatprep.subr.mxu0 0.0
        %1197 = vmatpush2.msra.mxu0 0.0
        %1198 = vmatprep.subr.mxu0 0.0
        %1199 = vmatpush2.msra.mxu0 0.0
        %1200 = vmatprep.subr.mxu0 0.0
        %1201 = vmatpush2.msra.mxu0 0.0
        %1202 = vmatprep.subr.mxu0 0.0
        %1203 = vmatpush2.msra.mxu0 0.0
        %1204 = vmatprep.subr.mxu0 0.0
        %1205 = vmatpush2.msra.mxu0 0.0
        %1206 = vmatprep.subr.mxu0 0.0
        %1207 = vmatpush2.msra.mxu0 0.0
        %1208 = vmatprep.subr.mxu0 0.0
        %1209 = vmatpush2.msra.mxu0 0.0
        %1210 = vmatprep.subr.mxu0 0.0
        %1211 = vmatpush2.msra.mxu0 0.0
        %1212 = vmatprep.subr.mxu0 0.0
        %1213 = vmatpush2.msra.mxu0 0.0
        %1214 = vmatprep.mubr.f32.mxu0 0.0
        %1215 = vmatmul.mubr.f32.gmra.mxu0 %v1123
        %v1216 = vpop.f32.mrf.mxu0
        %v1217 = vadd.f32 %v1084, %v1216
        %v1218 = vpop.f32.mrf.mxu0
        %1219 = vmatprep.mubr.f32.mxu0 0.0
        %1220 = vmatmul.mubr.f32.gmra.mxu0 %v1126
        %v1221 = vpop.f32.mrf.mxu0
        %v1222 = vadd.f32 %v1089, %v1221
        %v1223 = vpop.f32.mrf.mxu0
        %1224 = vmatprep.mubr.f32.mxu0 0.0
        %1225 = vmatmul.mubr.f32.gmra.mxu0 %v1129
        %v1226 = vpop.f32.mrf.mxu0
        %v1227 = vadd.f32 %v1094, %v1226
        %v1228 = vpop.f32.mrf.mxu0
        %1229 = vmatprep.mubr.f32.mxu0 0.0
        %1230 = vmatmul.mubr.f32.gmra.mxu0 %v1132
        %v1231 = vpop.f32.mrf.mxu0
        %v1232 = vadd.f32 %v1099, %v1231
        %v1233 = vpop.f32.mrf.mxu0
        %1234 = vmatprep.mubr.f32.mxu0 0.0
        %1235 = vmatmul.mubr.f32.gmra.mxu0 %v1135
        %v1236 = vpop.f32.mrf.mxu0
        %v1237 = vadd.f32 %v1104, %v1236
        %v1238 = vpop.f32.mrf.mxu0
        %1239 = vmatprep.mubr.f32.mxu0 0.0
        %1240 = vmatmul.mubr.f32.gmra.mxu0 %v1138
        %v1241 = vpop.f32.mrf.mxu0
        %v1242 = vadd.f32 %v1109, %v1241
        %v1243 = vpop.f32.mrf.mxu0
        %1244 = vmatprep.mubr.f32.mxu0 0.0
        %1245 = vmatmul.mubr.f32.gmra.mxu0 %v1141
        %v1246 = vpop.f32.mrf.mxu0
        %v1247 = vadd.f32 %v1114, %v1246
        %v1248 = vpop.f32.mrf.mxu0
        %1249 = vmatprep.mubr.f32.mxu0 0.0
        %1250 = vmatmul.mubr.f32.gmra.mxu0 %v1144
        %v1251 = vpop.f32.mrf.mxu0
        %v1252 = vadd.f32 %v1119, %v1251
        %v1253 = vpop.f32.mrf.mxu0
        %1254 = vdwg.mxu0
        %v1255 = vmax.f32 %v1217, 0.0
        %v1256 = vmax.f32 %v1222, 0.0
        %v1257 = vmax.f32 %v1227, 0.0
        %v1258 = vmax.f32 %v1232, 0.0
        %v1259 = vmax.f32 %v1237, 0.0
        %v1260 = vmax.f32 %v1242, 0.0
        %v1261 = vmax.f32 %v1247, 0.0
        %v1262 = vmax.f32 %v1252, 0.0
        %1263 = vset.pattern.permute.xlu0 68
        %1264 = vperm.xlu0 %1263, %v312
        %v1265 = vpop.permute.xlu0 %1264
        %1267 = vset.pattern.permute.xlu0 68
        %1268 = vperm.xlu0 %1267, %v314
        %v1269 = vpop.permute.xlu0 %1268
        %1271 = vset.pattern.permute.xlu0 68
        %1272 = vperm.xlu0 %1271, %v316
        %v1273 = vpop.permute.xlu0 %1272
        %1275 = vset.pattern.permute.xlu0 68
        %1276 = vperm.xlu0 %1275, %v318
        %v1277 = vpop.permute.xlu0 %1276
        %1279 = vset.pattern.permute.xlu0 68
        %1280 = vperm.xlu0 %1279, %v320
        %v1281 = vpop.permute.xlu0 %1280
        %1283 = vset.pattern.permute.xlu0 68
        %1284 = vperm.xlu0 %1283, %v322
        %v1285 = vpop.permute.xlu0 %1284
        %1287 = vset.pattern.permute.xlu0 68
        %1288 = vperm.xlu0 %1287, %v324
        %v1289 = vpop.permute.xlu0 %1288
        %1291 = vset.pattern.permute.xlu0 68
        %1292 = vperm.xlu0 %1291, %v326
        %v1293 = vpop.permute.xlu0 %1292
        %vm1295 = vcmask 523264
        %v1296 = vsel %vm1295, %v311, 0
        %v1298 = vsel %vm1295, %v313, 0
        %v1300 = vsel %vm1295, %v315, 0
        %v1302 = vsel %vm1295, %v317, 0
        %v1304 = vsel %vm1295, %v319, 0
        %v1306 = vsel %vm1295, %v321, 0
        %v1308 = vsel %vm1295, %v323, 0
        %v1310 = vsel %vm1295, %v325, 0
        %1312 = vmatprep.subr.mxu0 0.0
        %1313 = vmatpush1.msra.mxu0 0.0
        %1314 = vmatprep.subr.mxu0 0.0
        %1315 = vmatpush1.msra.mxu0 0.0
        %1316 = vmatprep.subr.mxu0 0.0
        %1317 = vmatpush1.msra.mxu0 0.0
        %1318 = vmatprep.subr.mxu0 0.0
        %1319 = vmatpush1.msra.mxu0 0.0
        %1320 = vmatprep.subr.mxu0 0.0
        %1321 = vmatpush1.msra.mxu0 0.0
        %1322 = vmatprep.subr.mxu0 0.0
        %1323 = vmatpush1.msra.mxu0 0.0
        %1324 = vmatprep.subr.mxu0 0.0
        %1325 = vmatpush1.msra.mxu0 0.0
        %1326 = vmatprep.subr.mxu0 0.0
        %1327 = vmatpush1.msra.mxu0 0.0
        %1328 = vmatprep.subr.mxu0 0.0
        %1329 = vmatpush1.msra.mxu0 %v1262
        %1330 = vmatprep.subr.mxu0 0.0
        %1331 = vmatpush1.msra.mxu0 %v1261
        %1332 = vmatprep.subr.mxu0 0.0
        %1333 = vmatpush1.msra.mxu0 %v1260
        %1334 = vmatprep.subr.mxu0 0.0
        %1335 = vmatpush1.msra.mxu0 %v1259
        %1336 = vmatprep.subr.mxu0 0.0
        %1337 = vmatpush1.msra.mxu0 %v1258
        %1338 = vmatprep.subr.mxu0 0.0
        %1339 = vmatpush1.msra.mxu0 %v1257
        %1340 = vmatprep.subr.mxu0 0.0
        %1341 = vmatpush1.msra.mxu0 %v1256
        %1342 = vmatprep.subr.mxu0 0.0
        %1343 = vmatpush1.msra.mxu0 %v1255
        %1344 = vmatprep.subr.mxu0 0.0
        %1345 = vmatpush2.msra.mxu0 0.0
        %1346 = vmatprep.subr.mxu0 0.0
        %1347 = vmatpush2.msra.mxu0 0.0
        %1348 = vmatprep.subr.mxu0 0.0
        %1349 = vmatpush2.msra.mxu0 0.0
        %1350 = vmatprep.subr.mxu0 0.0
        %1351 = vmatpush2.msra.mxu0 0.0
        %1352 = vmatprep.subr.mxu0 0.0
        %1353 = vmatpush2.msra.mxu0 0.0
        %1354 = vmatprep.subr.mxu0 0.0
        %1355 = vmatpush2.msra.mxu0 0.0
        %1356 = vmatprep.subr.mxu0 0.0
        %1357 = vmatpush2.msra.mxu0 0.0
        %1358 = vmatprep.subr.mxu0 0.0
        %1359 = vmatpush2.msra.mxu0 0.0
        %1360 = vmatprep.subr.mxu0 0.0
        %1361 = vmatpush2.msra.mxu0 0.0
        %1362 = vmatprep.subr.mxu0 0.0
        %1363 = vmatpush2.msra.mxu0 0.0
        %1364 = vmatprep.subr.mxu0 0.0
        %1365 = vmatpush2.msra.mxu0 0.0
        %1366 = vmatprep.subr.mxu0 0.0
        %1367 = vmatpush2.msra.mxu0 0.0
        %1368 = vmatprep.subr.mxu0 0.0
        %1369 = vmatpush2.msra.mxu0 0.0
        %1370 = vmatprep.subr.mxu0 0.0
        %1371 = vmatpush2.msra.mxu0 0.0
        %1372 = vmatprep.subr.mxu0 0.0
        %1373 = vmatpush2.msra.mxu0 0.0
        %1374 = vmatprep.subr.mxu0 0.0
        %1375 = vmatpush2.msra.mxu0 0.0
        %1376 = vmatprep.mubr.f32.mxu0 0.0
        %1377 = vmatmul.mubr.f32.gmra.mxu0 %v1296
        %v1378 = vpop.f32.mrf.mxu0
        %v1379 = vadd.f32 %v1265, %v1378
        %v1380 = vpop.f32.mrf.mxu0
        %1381 = vmatprep.mubr.f32.mxu0 0.0
        %1382 = vmatmul.mubr.f32.gmra.mxu0 %v1298
        %v1383 = vpop.f32.mrf.mxu0
        %v1384 = vadd.f32 %v1269, %v1383
        %v1385 = vpop.f32.mrf.mxu0
        %1386 = vmatprep.mubr.f32.mxu0 0.0
        %1387 = vmatmul.mubr.f32.gmra.mxu0 %v1300
        %v1388 = vpop.f32.mrf.mxu0
        %v1389 = vadd.f32 %v1273, %v1388
        %v1390 = vpop.f32.mrf.mxu0
        %1391 = vmatprep.mubr.f32.mxu0 0.0
        %1392 = vmatmul.mubr.f32.gmra.mxu0 %v1302
        %v1393 = vpop.f32.mrf.mxu0
        %v1394 = vadd.f32 %v1277, %v1393
        %v1395 = vpop.f32.mrf.mxu0
        %1396 = vmatprep.mubr.f32.mxu0 0.0
        %1397 = vmatmul.mubr.f32.gmra.mxu0 %v1304
        %v1398 = vpop.f32.mrf.mxu0
        %v1399 = vadd.f32 %v1281, %v1398
        %v1400 = vpop.f32.mrf.mxu0
        %1401 = vmatprep.mubr.f32.mxu0 0.0
        %1402 = vmatmul.mubr.f32.gmra.mxu0 %v1306
        %v1403 = vpop.f32.mrf.mxu0
        %v1404 = vadd.f32 %v1285, %v1403
        %v1405 = vpop.f32.mrf.mxu0
        %1406 = vmatprep.mubr.f32.mxu0 0.0
        %1407 = vmatmul.mubr.f32.gmra.mxu0 %v1308
        %v1408 = vpop.f32.mrf.mxu0
        %v1409 = vadd.f32 %v1289, %v1408
        %v1410 = vpop.f32.mrf.mxu0
        %1411 = vmatprep.mubr.f32.mxu0 0.0
        %1412 = vmatmul.mubr.f32.gmra.mxu0 %v1310
        %v1413 = vpop.f32.mrf.mxu0
        %v1414 = vadd.f32 %v1293, %v1413
        %v1415 = vpop.f32.mrf.mxu0
        %1416 = vdwg.mxu0
        %v1417 = vmax.f32 %v1379, 0.0
        %v1418 = vmax.f32 %v1384, 0.0
        %v1419 = vmax.f32 %v1389, 0.0
        %v1420 = vmax.f32 %v1394, 0.0
        %v1421 = vmax.f32 %v1399, 0.0
        %v1422 = vmax.f32 %v1404, 0.0
        %v1423 = vmax.f32 %v1409, 0.0
        %v1424 = vmax.f32 %v1414, 0.0
        %1425 = vset.pattern.permute.xlu0 69
        %1426 = vperm.xlu0 %1425, %v312
        %v1427 = vpop.permute.xlu0 %1426
        %1429 = vset.pattern.permute.xlu0 69
        %1430 = vperm.xlu0 %1429, %v314
        %v1431 = vpop.permute.xlu0 %1430
        %1433 = vset.pattern.permute.xlu0 69
        %1434 = vperm.xlu0 %1433, %v316
        %v1435 = vpop.permute.xlu0 %1434
        %1437 = vset.pattern.permute.xlu0 69
        %1438 = vperm.xlu0 %1437, %v318
        %v1439 = vpop.permute.xlu0 %1438
        %1441 = vset.pattern.permute.xlu0 69
        %1442 = vperm.xlu0 %1441, %v320
        %v1443 = vpop.permute.xlu0 %1442
        %1445 = vset.pattern.permute.xlu0 69
        %1446 = vperm.xlu0 %1445, %v322
        %v1447 = vpop.permute.xlu0 %1446
        %1449 = vset.pattern.permute.xlu0 69
        %1450 = vperm.xlu0 %1449, %v324
        %v1451 = vpop.permute.xlu0 %1450
        %1453 = vset.pattern.permute.xlu0 69
        %1454 = vperm.xlu0 %1453, %v326
        %v1455 = vpop.permute.xlu0 %1454
        %v1457 = vmul.f32 %v1417, %v1427
        %v1458 = vmul.f32 %v1418, %v1431
        %v1459 = vmul.f32 %v1419, %v1435
        %v1460 = vmul.f32 %v1420, %v1439
        %v1461 = vmul.f32 %v1421, %v1443
        %v1462 = vmul.f32 %v1422, %v1447
        %v1463 = vmul.f32 %v1423, %v1451
        %v1464 = vmul.f32 %v1424, %v1455
        %v1465 = vadd.f32 %v1457, %v1458
        %v1466 = vadd.f32 %v1465, %v1459
        %v1467 = vadd.f32 %v1466, %v1460
        %v1468 = vadd.f32 %v1467, %v1461
        %v1469 = vadd.f32 %v1468, %v1462
        %v1470 = vadd.f32 %v1469, %v1463
        %v1471 = vadd.f32 %v1470, %v1464
        %v1472 = vrot.slane %v1471, 4
        %v1473 = vadd.f32 %v1471, %v1472
        %v1474 = vrot.slane %v1473, 2
        %v1475 = vadd.f32 %v1473, %v1474
        %v1476 = vrot.slane %v1475, 1
        %v1477 = vadd.f32 %v1475, %v1476
        %1478 = vset.pattern.permute.xlu0 70
        %1479 = vperm.xlu0 %1478, %v312
        %v1480 = vpop.permute.xlu0 %1479
        %v1482 = vadd.f32 %v1477, %v1480
        %v1484 = vrot.slane %v1062, 4
        %v1486 = vsub.f32 %v1484, %v333
        %v1487 = vmul.f32 %v1486, %v718
        %v1488 = vmul.f32 %v1487, %v1487
        %v1489 = vsel %vm328, %v1488, 0.0
        %v1490 = vrot.slane %v1489, 4
        %v1491 = vadd.f32 %v1489, %v1490
        %v1492 = vrot.slane %v1491, 2
        %v1493 = vadd.f32 %v1491, %v1492
        %v1494 = vrot.slane %v1493, 1
        %v1495 = vadd.f32 %v1493, %v1494
        %v1496 = vrsqrt.pop %v1495
        %v1497 = vmul.f32 %v1495, %v1496
        %vm1498 = vcmp.eq.f32.partialorder %v1495, inf
        %v1499 = vsel %vm1498, %v1495, %v1497
        %vm1500 = vcmp.eq.f32.partialorder %v1495, 0.0
        %v1501 = vand.u32 %v1495, 2147483648
        %v1502 = vsel %vm1500, %v1501, %v1499
        %v1503 = vsel %vm328, %v1487, %v1502
        %v1505 = vsel %vm1146, %v1503, 0
        %1507 = vmatprep.subr.mxu0 0.0
        %1508 = vmatpush1.msra.mxu0 0.0
        %1509 = vmatprep.subr.mxu0 0.0
        %1510 = vmatpush1.msra.mxu0 0.0
        %1511 = vmatprep.subr.mxu0 0.0
        %1512 = vmatpush1.msra.mxu0 0.0
        %1513 = vmatprep.subr.mxu0 0.0
        %1514 = vmatpush1.msra.mxu0 0.0
        %1515 = vmatprep.subr.mxu0 0.0
        %1516 = vmatpush1.msra.mxu0 0.0
        %1517 = vmatprep.subr.mxu0 0.0
        %1518 = vmatpush1.msra.mxu0 0.0
        %1519 = vmatprep.subr.mxu0 0.0
        %1520 = vmatpush1.msra.mxu0 0.0
        %1521 = vmatprep.subr.mxu0 0.0
        %1522 = vmatpush1.msra.mxu0 0.0
        %1523 = vmatprep.subr.mxu0 0.0
        %1524 = vmatpush1.msra.mxu0 0.0
        %1525 = vmatprep.subr.mxu0 0.0
        %1526 = vmatpush1.msra.mxu0 0.0
        %1527 = vmatprep.subr.mxu0 0.0
        %1528 = vmatpush1.msra.mxu0 0.0
        %1529 = vmatprep.subr.mxu0 0.0
        %1530 = vmatpush1.msra.mxu0 0.0
        %1531 = vmatprep.subr.mxu0 0.0
        %1532 = vmatpush1.msra.mxu0 0.0
        %1533 = vmatprep.subr.mxu0 0.0
        %1534 = vmatpush1.msra.mxu0 0.0
        %1535 = vmatprep.subr.mxu0 0.0
        %1536 = vmatpush1.msra.mxu0 0.0
        %1537 = vmatprep.subr.mxu0 0.0
        %1538 = vmatpush1.msra.mxu0 %v1505
        %1539 = vmatprep.subr.mxu0 0.0
        %1540 = vmatpush2.msra.mxu0 0.0
        %1541 = vmatprep.subr.mxu0 0.0
        %1542 = vmatpush2.msra.mxu0 0.0
        %1543 = vmatprep.subr.mxu0 0.0
        %1544 = vmatpush2.msra.mxu0 0.0
        %1545 = vmatprep.subr.mxu0 0.0
        %1546 = vmatpush2.msra.mxu0 0.0
        %1547 = vmatprep.subr.mxu0 0.0
        %1548 = vmatpush2.msra.mxu0 0.0
        %1549 = vmatprep.subr.mxu0 0.0
        %1550 = vmatpush2.msra.mxu0 0.0
        %1551 = vmatprep.subr.mxu0 0.0
        %1552 = vmatpush2.msra.mxu0 0.0
        %1553 = vmatprep.subr.mxu0 0.0
        %1554 = vmatpush2.msra.mxu0 0.0
        %1555 = vmatprep.subr.mxu0 0.0
        %1556 = vmatpush2.msra.mxu0 0.0
        %1557 = vmatprep.subr.mxu0 0.0
        %1558 = vmatpush2.msra.mxu0 0.0
        %1559 = vmatprep.subr.mxu0 0.0
        %1560 = vmatpush2.msra.mxu0 0.0
        %1561 = vmatprep.subr.mxu0 0.0
        %1562 = vmatpush2.msra.mxu0 0.0
        %1563 = vmatprep.subr.mxu0 0.0
        %1564 = vmatpush2.msra.mxu0 0.0
        %1565 = vmatprep.subr.mxu0 0.0
        %1566 = vmatpush2.msra.mxu0 0.0
        %1567 = vmatprep.subr.mxu0 0.0
        %1568 = vmatpush2.msra.mxu0 0.0
        %1569 = vmatprep.subr.mxu0 0.0
        %1570 = vmatpush2.msra.mxu0 0.0
        %1571 = vmatprep.mubr.f32.mxu0 0.0
        %1572 = vmatmul.mubr.f32.gmra.mxu0 %v1123
        %v1573 = vpop.f32.mrf.mxu0
        %v1574 = vadd.f32 %v1084, %v1573
        %v1575 = vpop.f32.mrf.mxu0
        %1576 = vmatprep.mubr.f32.mxu0 0.0
        %1577 = vmatmul.mubr.f32.gmra.mxu0 %v1126
        %v1578 = vpop.f32.mrf.mxu0
        %v1579 = vadd.f32 %v1089, %v1578
        %v1580 = vpop.f32.mrf.mxu0
        %1581 = vmatprep.mubr.f32.mxu0 0.0
        %1582 = vmatmul.mubr.f32.gmra.mxu0 %v1129
        %v1583 = vpop.f32.mrf.mxu0
        %v1584 = vadd.f32 %v1094, %v1583
        %v1585 = vpop.f32.mrf.mxu0
        %1586 = vmatprep.mubr.f32.mxu0 0.0
        %1587 = vmatmul.mubr.f32.gmra.mxu0 %v1132
        %v1588 = vpop.f32.mrf.mxu0
        %v1589 = vadd.f32 %v1099, %v1588
        %v1590 = vpop.f32.mrf.mxu0
        %1591 = vmatprep.mubr.f32.mxu0 0.0
        %1592 = vmatmul.mubr.f32.gmra.mxu0 %v1135
        %v1593 = vpop.f32.mrf.mxu0
        %v1594 = vadd.f32 %v1104, %v1593
        %v1595 = vpop.f32.mrf.mxu0
        %1596 = vmatprep.mubr.f32.mxu0 0.0
        %1597 = vmatmul.mubr.f32.gmra.mxu0 %v1138
        %v1598 = vpop.f32.mrf.mxu0
        %v1599 = vadd.f32 %v1109, %v1598
        %v1600 = vpop.f32.mrf.mxu0
        %1601 = vmatprep.mubr.f32.mxu0 0.0
        %1602 = vmatmul.mubr.f32.gmra.mxu0 %v1141
        %v1603 = vpop.f32.mrf.mxu0
        %v1604 = vadd.f32 %v1114, %v1603
        %v1605 = vpop.f32.mrf.mxu0
        %1606 = vmatprep.mubr.f32.mxu0 0.0
        %1607 = vmatmul.mubr.f32.gmra.mxu0 %v1144
        %v1608 = vpop.f32.mrf.mxu0
        %v1609 = vadd.f32 %v1119, %v1608
        %v1610 = vpop.f32.mrf.mxu0
        %1611 = vdwg.mxu0
        %v1612 = vmax.f32 %v1574, 0.0
        %v1613 = vmax.f32 %v1579, 0.0
        %v1614 = vmax.f32 %v1584, 0.0
        %v1615 = vmax.f32 %v1589, 0.0
        %v1616 = vmax.f32 %v1594, 0.0
        %v1617 = vmax.f32 %v1599, 0.0
        %v1618 = vmax.f32 %v1604, 0.0
        %v1619 = vmax.f32 %v1609, 0.0
        %1620 = vmatprep.subr.mxu0 0.0
        %1621 = vmatpush1.msra.mxu0 0.0
        %1622 = vmatprep.subr.mxu0 0.0
        %1623 = vmatpush1.msra.mxu0 0.0
        %1624 = vmatprep.subr.mxu0 0.0
        %1625 = vmatpush1.msra.mxu0 0.0
        %1626 = vmatprep.subr.mxu0 0.0
        %1627 = vmatpush1.msra.mxu0 0.0
        %1628 = vmatprep.subr.mxu0 0.0
        %1629 = vmatpush1.msra.mxu0 0.0
        %1630 = vmatprep.subr.mxu0 0.0
        %1631 = vmatpush1.msra.mxu0 0.0
        %1632 = vmatprep.subr.mxu0 0.0
        %1633 = vmatpush1.msra.mxu0 0.0
        %1634 = vmatprep.subr.mxu0 0.0
        %1635 = vmatpush1.msra.mxu0 0.0
        %1636 = vmatprep.subr.mxu0 0.0
        %1637 = vmatpush1.msra.mxu0 %v1619
        %1638 = vmatprep.subr.mxu0 0.0
        %1639 = vmatpush1.msra.mxu0 %v1618
        %1640 = vmatprep.subr.mxu0 0.0
        %1641 = vmatpush1.msra.mxu0 %v1617
        %1642 = vmatprep.subr.mxu0 0.0
        %1643 = vmatpush1.msra.mxu0 %v1616
        %1644 = vmatprep.subr.mxu0 0.0
        %1645 = vmatpush1.msra.mxu0 %v1615
        %1646 = vmatprep.subr.mxu0 0.0
        %1647 = vmatpush1.msra.mxu0 %v1614
        %1648 = vmatprep.subr.mxu0 0.0
        %1649 = vmatpush1.msra.mxu0 %v1613
        %1650 = vmatprep.subr.mxu0 0.0
        %1651 = vmatpush1.msra.mxu0 %v1612
        %1652 = vmatprep.subr.mxu0 0.0
        %1653 = vmatpush2.msra.mxu0 0.0
        %1654 = vmatprep.subr.mxu0 0.0
        %1655 = vmatpush2.msra.mxu0 0.0
        %1656 = vmatprep.subr.mxu0 0.0
        %1657 = vmatpush2.msra.mxu0 0.0
        %1658 = vmatprep.subr.mxu0 0.0
        %1659 = vmatpush2.msra.mxu0 0.0
        %1660 = vmatprep.subr.mxu0 0.0
        %1661 = vmatpush2.msra.mxu0 0.0
        %1662 = vmatprep.subr.mxu0 0.0
        %1663 = vmatpush2.msra.mxu0 0.0
        %1664 = vmatprep.subr.mxu0 0.0
        %1665 = vmatpush2.msra.mxu0 0.0
        %1666 = vmatprep.subr.mxu0 0.0
        %1667 = vmatpush2.msra.mxu0 0.0
        %1668 = vmatprep.subr.mxu0 0.0
        %1669 = vmatpush2.msra.mxu0 0.0
        %1670 = vmatprep.subr.mxu0 0.0
        %1671 = vmatpush2.msra.mxu0 0.0
        %1672 = vmatprep.subr.mxu0 0.0
        %1673 = vmatpush2.msra.mxu0 0.0
        %1674 = vmatprep.subr.mxu0 0.0
        %1675 = vmatpush2.msra.mxu0 0.0
        %1676 = vmatprep.subr.mxu0 0.0
        %1677 = vmatpush2.msra.mxu0 0.0
        %1678 = vmatprep.subr.mxu0 0.0
        %1679 = vmatpush2.msra.mxu0 0.0
        %1680 = vmatprep.subr.mxu0 0.0
        %1681 = vmatpush2.msra.mxu0 0.0
        %1682 = vmatprep.subr.mxu0 0.0
        %1683 = vmatpush2.msra.mxu0 0.0
        %1684 = vmatprep.mubr.f32.mxu0 0.0
        %1685 = vmatmul.mubr.f32.gmra.mxu0 %v1296
        %v1686 = vpop.f32.mrf.mxu0
        %v1687 = vadd.f32 %v1265, %v1686
        %v1688 = vpop.f32.mrf.mxu0
        %1689 = vmatprep.mubr.f32.mxu0 0.0
        %1690 = vmatmul.mubr.f32.gmra.mxu0 %v1298
        %v1691 = vpop.f32.mrf.mxu0
        %v1692 = vadd.f32 %v1269, %v1691
        %v1693 = vpop.f32.mrf.mxu0
        %1694 = vmatprep.mubr.f32.mxu0 0.0
        %1695 = vmatmul.mubr.f32.gmra.mxu0 %v1300
        %v1696 = vpop.f32.mrf.mxu0
        %v1697 = vadd.f32 %v1273, %v1696
        %v1698 = vpop.f32.mrf.mxu0
        %1699 = vmatprep.mubr.f32.mxu0 0.0
        %1700 = vmatmul.mubr.f32.gmra.mxu0 %v1302
        %v1701 = vpop.f32.mrf.mxu0
        %v1702 = vadd.f32 %v1277, %v1701
        %v1703 = vpop.f32.mrf.mxu0
        %1704 = vmatprep.mubr.f32.mxu0 0.0
        %1705 = vmatmul.mubr.f32.gmra.mxu0 %v1304
        %v1706 = vpop.f32.mrf.mxu0
        %v1707 = vadd.f32 %v1281, %v1706
        %v1708 = vpop.f32.mrf.mxu0
        %1709 = vmatprep.mubr.f32.mxu0 0.0
        %1710 = vmatmul.mubr.f32.gmra.mxu0 %v1306
        %v1711 = vpop.f32.mrf.mxu0
        %v1712 = vadd.f32 %v1285, %v1711
        %v1713 = vpop.f32.mrf.mxu0
        %1714 = vmatprep.mubr.f32.mxu0 0.0
        %1715 = vmatmul.mubr.f32.gmra.mxu0 %v1308
        %v1716 = vpop.f32.mrf.mxu0
        %v1717 = vadd.f32 %v1289, %v1716
        %v1718 = vpop.f32.mrf.mxu0
        %1719 = vmatprep.mubr.f32.mxu0 0.0
        %1720 = vmatmul.mubr.f32.gmra.mxu0 %v1310
        %v1721 = vpop.f32.mrf.mxu0
        %v1722 = vadd.f32 %v1293, %v1721
        %v1723 = vpop.f32.mrf.mxu0
        %1724 = vdwg.mxu0
        %v1725 = vmax.f32 %v1687, 0.0
        %v1726 = vmax.f32 %v1692, 0.0
        %v1727 = vmax.f32 %v1697, 0.0
        %v1728 = vmax.f32 %v1702, 0.0
        %v1729 = vmax.f32 %v1707, 0.0
        %v1730 = vmax.f32 %v1712, 0.0
        %v1731 = vmax.f32 %v1717, 0.0
        %v1732 = vmax.f32 %v1722, 0.0
        %v1733 = vmul.f32 %v1725, %v1427
        %v1734 = vmul.f32 %v1726, %v1431
        %v1735 = vmul.f32 %v1727, %v1435
        %v1736 = vmul.f32 %v1728, %v1439
        %v1737 = vmul.f32 %v1729, %v1443
        %v1738 = vmul.f32 %v1730, %v1447
        %v1739 = vmul.f32 %v1731, %v1451
        %v1740 = vmul.f32 %v1732, %v1455
        %v1741 = vadd.f32 %v1733, %v1734
        %v1742 = vadd.f32 %v1741, %v1735
        %v1743 = vadd.f32 %v1742, %v1736
        %v1744 = vadd.f32 %v1743, %v1737
        %v1745 = vadd.f32 %v1744, %v1738
        %v1746 = vadd.f32 %v1745, %v1739
        %v1747 = vadd.f32 %v1746, %v1740
        %v1748 = vrot.slane %v1747, 4
        %v1749 = vadd.f32 %v1747, %v1748
        %v1750 = vrot.slane %v1749, 2
        %v1751 = vadd.f32 %v1749, %v1750
        %v1752 = vrot.slane %v1751, 1
        %v1753 = vadd.f32 %v1751, %v1752
        %v1754 = vadd.f32 %v1753, %v1480
        %v1755 = vld [vmem:[%s310] sm:$0x1]
        %v1756 = vsub.f32 %v1482, %v1755
        %v1757 = vand.u32 2147483647, %v1756
        %1758 = vst [vmem:[%s286] sm:$0x1] %v1757
        %v1759 = vmul.f32 %v1754, -1.0
        %v1760 = vxor.u32 %v1759, 2147483648
        %v1761 = vmul.f32 %v1760, 1.442695
        %v1762 = vpow.pop %v1761
        %v1763 = vadd.f32 %v1762, 1.0
        %v1764 = vrcp.pop %v1763
        %v1765 = vmul.f32 1.0, %v1764
        %1766 = vst [vmem:[%s292] sm:$0x1] %v1765
        %1767 = vst [vmem:[%s298] sm:$0x1] %v716
        %s1768 = sand.u32 %s132, 1
        %s1769 = scalar_lea.sflag [#allocation4], %s1768
        %s1770 = sand.u32 %s132, 1
        %s1771 = scalar_lea.vmem [#allocation5], %s1770
        %s1772 = sand.u32 %s25, 1
        %s1773 = scalar_lea.sflag [#allocation7], %s1772
        %s1774 = sand.u32 %s158, 1
        %s1775 = scalar_lea.vmem [#allocation6], %s1774
        %s1776 = sand.u32 %s25, 1
        %s1777 = scalar_lea.sflag [#allocation7], %s1776
        %s1778 = sand.u32 %s184, 1
        %s1779 = scalar_lea.vmem [#allocation8], %s1778
        // Predicated region
        $region41: #{tpu_custom_call.1} parent=35 // pred_check
          %p1780 = pneg %p142
        $region42: #{tpu_custom_call.1} parent=35 // pred_check_branch
          %1782 = sbr.rel (%p1780) target = $region44
        $region43: #{tpu_custom_call.1} parent=35 // pred_region
          %s1784 = ssub.s32 16, 16
          %1785 = vsyncadd %s1769, %s1784
          %s1786 = smul.addr %s25, 16
          %s1787 = scalar_lea.hbm %s4, %s1786
          %s1789 = sshll.u32 %s1771, 4
          %s1790 = int_to_ptr.vmem [resolvable:$true] %s1789
          %1792 = dma.vmem_to_hbm [thread:$0]  %s1790, 16, %s1787, %s1769
        $region44: #{tpu_custom_call.1} parent=35 // pred_fallthru
          _
        // Predicated region
        $region45: #{tpu_custom_call.1} parent=35 // pred_check
          %p1793 = pneg %p168
        $region46: #{tpu_custom_call.1} parent=35 // pred_check_branch
          %1795 = sbr.rel (%p1793) target = $region48
        $region47: #{tpu_custom_call.1} parent=35 // pred_region
          %s1797 = ssub.s32 16, 16
          %1798 = vsyncadd %s1773, %s1797
          %s1799 = smul.addr %s25, 16
          %s1800 = scalar_lea.hbm %s5, %s1799
          %s1802 = sshll.u32 %s1775, 4
          %s1803 = int_to_ptr.vmem [resolvable:$true] %s1802
          %1805 = dma.vmem_to_hbm [thread:$0]  %s1803, 16, %s1800, %s1773
        $region48: #{tpu_custom_call.1} parent=35 // pred_fallthru
          _
        // Predicated region
        $region49: #{tpu_custom_call.1} parent=35 // pred_check
          %p1806 = pneg %p194
        $region50: #{tpu_custom_call.1} parent=35 // pred_check_branch
          %1808 = sbr.rel (%p1806) target = $region52
        $region51: #{tpu_custom_call.1} parent=35 // pred_region
          %s1810 = ssub.s32 16, 16
          %1811 = vsyncadd %s1777, %s1810
          %s1812 = smul.addr %s25, 16
          %s1813 = scalar_lea.hbm %s6, %s1812
          %s1815 = sshll.u32 %s1779, 4
          %s1816 = int_to_ptr.vmem [resolvable:$true] %s1815
          %1818 = dma.vmem_to_hbm [thread:$0]  %s1816, 16, %s1813, %s1777
        $region52: #{tpu_custom_call.1} parent=35 // pred_fallthru
          _
      $region36: #{tpu_custom_call.1} parent=5 // pred_fallthru
        _
      %p1819 = scmp.le.s32.totalorder 2, %s20
      // Predicated region
      $region53: #{tpu_custom_call.1} parent=5 // pred_check
        %p1820 = pneg %p1819
      $region54: #{tpu_custom_call.1} parent=5 // pred_check_branch
        %1822 = sbr.rel (%p1820) target = $region56
      $region55: #{tpu_custom_call.1} parent=5 // pred_region
        %s1823 = ssub.s32 %s20, 2
        // Predicated region
        $region57: #{tpu_custom_call.1} parent=55 // pred_check
          %p1824 = pneg %p148
        $region58: #{tpu_custom_call.1} parent=55 // pred_check_branch
          %1826 = sbr.rel (%p1824) target = $region60
        $region59: #{tpu_custom_call.1} parent=55 // pred_region
          %s1827 = sand.u32 %s133, 1
          %s1828 = scalar_lea.sflag [#allocation4], %s1827
          %s1829 = sand.u32 %s133, 1
          %s1830 = scalar_lea.vmem [#allocation5], %s1829
          %1831 = dma.done %s1828, 16
        $region60: #{tpu_custom_call.1} parent=55 // pred_fallthru
          _
        // Predicated region
        $region61: #{tpu_custom_call.1} parent=55 // pred_check
          %p1832 = pneg %p174
        $region62: #{tpu_custom_call.1} parent=55 // pred_check_branch
          %1834 = sbr.rel (%p1832) target = $region64
        $region63: #{tpu_custom_call.1} parent=55 // pred_region
          %s1835 = sand.u32 %s26, 1
          %s1836 = scalar_lea.sflag [#allocation7], %s1835
          %s1837 = sand.u32 %s159, 1
          %s1838 = scalar_lea.vmem [#allocation6], %s1837
          %1839 = dma.done %s1836, 16
        $region64: #{tpu_custom_call.1} parent=55 // pred_fallthru
          _
        // Predicated region
        $region65: #{tpu_custom_call.1} parent=55 // pred_check
          %p1840 = pneg %p200
        $region66: #{tpu_custom_call.1} parent=55 // pred_check_branch
          %1842 = sbr.rel (%p1840) target = $region68
        $region67: #{tpu_custom_call.1} parent=55 // pred_region
          %s1843 = sand.u32 %s26, 1
          %s1844 = scalar_lea.sflag [#allocation7], %s1843
          %s1845 = sand.u32 %s185, 1
          %s1846 = scalar_lea.vmem [#allocation8], %s1845
          %1847 = dma.done %s1844, 16
        $region68: #{tpu_custom_call.1} parent=55 // pred_fallthru
          _
      $region56: #{tpu_custom_call.1} parent=5 // pred_fallthru
        _
    $region6: #{tpu_custom_call.1} parent=1 // loop_footer
      %s24 = sadd.s32 1, %s20
    $region7: #{tpu_custom_call.1} parent=1 // loop_footer_branch
      %19 = sbr.rel target = $region3
    $region8: #{tpu_custom_call.1} parent=1 // loop_exit
      _
    %1848 = vsyncpa [#allocation3], 1
    %s1849 = scalar_lea.sflag [#allocation3], 1
    %1850 = vsyncpa %s1849, 1
    %1851 = vsyncpa [#allocation4], 1
    %s1852 = scalar_lea.sflag [#allocation4], 1
    %1853 = vsyncpa %s1852, 1
    %1854 = vsyncpa [#allocation7], 1
    %s1855 = scalar_lea.sflag [#allocation7], 1
    %1856 = vsyncpa %s1855, 1

</llo_original>
